<compile_context>
chip_gen: v7x
topology: tpu7x:2x2x1
jax: 0.10.0
libtpu: 0.0.40
codegen_flags: <defaults>
</compile_context>

<pallas_src>
import functools
import math

import jax
import jax.numpy as jnp
import numpy as np
from jax.experimental import pallas as pl
from jax.experimental.pallas import tpu as pltpu

BN_EPS = 1e-5

_VMEM_LIMIT_CACHE = None


def _vmem_limit_bytes():
    """~3/4 of physical VMEM (~96 MiB v5e/v6e, ~48 MiB v7x); 32 MiB fallback."""
    global _VMEM_LIMIT_CACHE
    if _VMEM_LIMIT_CACHE is None:
        limit = 32 * 1024 * 1024
        try:
            cap = getattr(pltpu.get_tpu_info(), "vmem_capacity_bytes", None)
            if cap:
                limit = max(32 * 1024 * 1024,
                            min(int(cap) * 3 // 4, 100 * 1024 * 1024))
        except Exception:
            pass
        _VMEM_LIMIT_CACHE = limit
    return _VMEM_LIMIT_CACHE


# --------------- Kernel 1: fused 1x1 conv+ReLU -> depthwise 3x3 s2 +ReLU -> 1x1 conv ---------------
def fused_merge_kernel(x_ref, w1_ref, b1_ref, wdw_ref, b2_ref, w3_ref, b3_ref,
                       z_ref, psum_ref, pssq_ref, *, Hs, Ws, Ho, Wo):
    # x_ref:  (1, 4, Hs, Ws, C) f32 -- parity block 2p+q holds padded pixel (2a+p, 2c+q)
    # w1_ref: (C, hidden) bf16;  w3_ref: (hidden, out_c) bf16;  biases / depthwise f32.
    C = x_ref.shape[-1]
    hidden = w1_ref.shape[1]

    b1v = b1_ref[...]
    b2v = b2_ref[...]
    b3v = b3_ref[...]

    # ---- Stage 1: one big pointwise matmul over all 4 parity planes (bf16 MXU, f32 acc) ----
    x_all = x_ref[0].reshape(4 * Hs * Ws, C).astype(jnp.bfloat16)
    h_pre = jnp.dot(x_all, w1_ref[...], preferred_element_type=jnp.float32)
    h_pre = h_pre.reshape(4, Hs, Ws, hidden)

    # In-kernel validity of padded positions (replaces the old lane-sparse HBM mask input).
    rid = jax.lax.broadcasted_iota(jnp.int32, (Hs, Ws, 1), 0)
    cid = jax.lax.broadcasted_iota(jnp.int32, (Hs, Ws, 1), 1)

    acc = jnp.zeros((Ho, Wo, hidden), jnp.float32)
    for k in range(4):
        p, q = divmod(k, 2)
        rlo, rhi = (1, Ho) if p == 0 else (0, Ho - 1)     # 1 <= 2*rr+p <= H
        clo, chi = (1, Wo) if q == 0 else (0, Wo - 1)     # 1 <= 2*cc+q <= W
        valid = (rid >= rlo) & (rid <= rhi) & (cid >= clo) & (cid <= chi)
        # Bias + ReLU + padding mask in one fused expression (single pass over h).
        h = jnp.where(valid, jnp.maximum(h_pre[k] + b1v, 0.0), 0.0)
        # ---- Stage 2: all depthwise-3x3 taps served by this parity as ONE partial sum,
        # then a single acc update (4 acc RMW passes total instead of 9). ----
        partial = None
        for di in range(p, 3, 2):
            a0 = di // 2
            for dj in range(q, 3, 2):
                c0 = dj // 2
                # TODO(synk): the c0 == 1 slice is sublane-unaligned (offset-1 along Ws);
                # pltpu.roll would move that shift to the XLU once its rotation convention
                # is verified on-device -- kept as a slice for guaranteed correctness.
                tap = h[a0:a0 + Ho, c0:c0 + Wo, :] * wdw_ref[di, dj, :][None, None, :]
                partial = tap if partial is None else partial + tap
        acc = acc + partial

    h2 = jnp.maximum(acc + b2v, 0.0)                          # (Ho, Wo, hidden) f32
    # ---- Stage 3: pointwise conv (bf16 MXU, f32 acc); BN applied later with GLOBAL stats ----
    z = jnp.dot(h2.reshape(Ho * Wo, hidden).astype(jnp.bfloat16), w3_ref[...],
                preferred_element_type=jnp.float32) + b3v     # (Ho*Wo, out_c) f32
    # Per-batch partial BN statistics in f32 (from the f32 z, before the bf16 store).
    psum_ref[0] = jnp.sum(z, axis=0, keepdims=True)
    pssq_ref[0] = jnp.sum(z * z, axis=0, keepdims=True)
    z_ref[0] = z.astype(z_ref.dtype)                          # bf16 staging to HBM


def fused_patch_merge(x6, w1_bf, b1, wdw, b2, w3_bf, b3, *, Ho, Wo):
    B, _, Hs, Ws, C = x6.shape
    hidden = w1_bf.shape[1]
    out_c = w3_bf.shape[1]
    kern = functools.partial(fused_merge_kernel, Hs=Hs, Ws=Ws, Ho=Ho, Wo=Wo)
    # TODO(synk): for very large input_resolution (v7x has only 64 MiB VMEM) add an
    # output-row-tile grid axis with a 1-row halo; per-batch blocks suffice for typical
    # Swin stage resolutions.
    return pl.pallas_call(
        kern,
        out_shape=(
            jax.ShapeDtypeStruct((B, Ho * Wo, out_c), jnp.bfloat16),
            jax.ShapeDtypeStruct((B, 1, out_c), jnp.float32),
            jax.ShapeDtypeStruct((B, 1, out_c), jnp.float32),
        ),
        grid_spec=pltpu.PrefetchScalarGridSpec(
            num_scalar_prefetch=0,
            grid=(B,),
            in_specs=[
                pl.BlockSpec((1, 4, Hs, Ws, C), lambda b: (b, 0, 0, 0, 0)),
                pl.BlockSpec((C, hidden), lambda b: (0, 0)),
                pl.BlockSpec((1, hidden), lambda b: (0, 0)),
                pl.BlockSpec((3, 3, hidden), lambda b: (0, 0, 0)),
                pl.BlockSpec((1, hidden), lambda b: (0, 0)),
                pl.BlockSpec((hidden, out_c), lambda b: (0, 0)),
                pl.BlockSpec((1, out_c), lambda b: (0, 0)),
            ],
            out_specs=(
                pl.BlockSpec((1, Ho * Wo, out_c), lambda b: (b, 0, 0)),
                pl.BlockSpec((1, 1, out_c), lambda b: (b, 0, 0)),
                pl.BlockSpec((1, 1, out_c), lambda b: (b, 0, 0)),
            ),
        ),
        compiler_params=pltpu.CompilerParams(
            dimension_semantics=("parallel",),
            vmem_limit_bytes=_vmem_limit_bytes()),
    )(x6, w1_bf, b1, wdw, b2, w3_bf, b3)


# ------------------------- Kernel 2: BatchNorm normalize (scale/shift), tiled -------------------------
def bn_apply_kernel(z_ref, sc_ref, sh_ref, o_ref):
    z = z_ref[...].astype(jnp.float32)                        # bf16 -> f32 in VMEM
    o_ref[...] = (z * sc_ref[...] + sh_ref[...]).astype(o_ref.dtype)


def bn_apply(z2d, scale, shift, *, row_tile=4096):
    n, c = z2d.shape
    rt = n if n <= row_tile else row_tile         # fixed tile + cdiv grid; elementwise so the
    grid = (pl.cdiv(n, rt),)                      # ragged tail is handled by masked edge blocks.
    # TODO(synk): input_output_aliases would drop one HBM allocation, but z is staged in bf16
    # while the module output is f32, so the buffers cannot alias.
    return pl.pallas_call(
        bn_apply_kernel,
        out_shape=jax.ShapeDtypeStruct((n, c), jnp.float32),
        grid_spec=pltpu.PrefetchScalarGridSpec(
            num_scalar_prefetch=0,
            grid=grid,
            in_specs=[
                pl.BlockSpec((rt, c), lambda i: (i, 0)),
                pl.BlockSpec((1, c), lambda i: (0, 0)),
                pl.BlockSpec((1, c), lambda i: (0, 0)),
            ],
            out_specs=pl.BlockSpec((rt, c), lambda i: (i, 0)),
        ),
        compiler_params=pltpu.CompilerParams(
            dimension_semantics=("parallel",),
            vmem_limit_bytes=_vmem_limit_bytes()),
    )(z2d, scale, shift)


def apply_batchnorm(z, scale, shift):
    # z: (B, P, out_c) bf16.  Leading-dim collapse only (no HBM relayout); the BN-apply
    # kernel reads z lane-native and writes the f32 output.
    # TODO(synk): emitting z lane-dense (last dim = lcm(out_c, 128)) straight from kernel 1
    # would make both kernels' stores unmasked when out_c % 128 != 0; it needs an in-kernel
    # lane-refolding reshape and is left out to keep lowering robust.
    B, P, out_c = z.shape
    out = bn_apply(z.reshape(B * P, out_c), scale, shift)
    return out.reshape(B, P, out_c)


# ---------------------------------- forward (glue + kernels) ----------------------------------
def patch_merging_forward(x, params, input_resolution):
    H, W = input_resolution
    B, L, C = x.shape
    assert L == H * W, "input feature has wrong size"
    assert H % 2 == 0 and W % 2 == 0
    out_c = params["w3"].shape[1]
    Ho, Wo = H // 2, W // 2
    Hs = Ho + 1                                   # rows per parity block of the padded image
    Ws = ((Wo + 1 + 7) // 8) * 8                  # cols per parity block, sublane multiple

    # ---- cheap glue on the *small* input (C = dim channels; ~8x cheaper than doing it on h1) ----
    # TODO(synk): the parity deinterleave could move in-kernel (strided reads of padded x) to
    # drop this transpose; x is ~8x smaller than h1 so it is a secondary cost.
    xr = x.reshape(B, H, W, C)
    x_pad = jnp.pad(xr, ((0, 0), (1, 1), (1, 2 * Ws - W - 1), (0, 0)))  # (B, 2*Hs, 2*Ws, C)
    x6 = x_pad.reshape(B, Hs, 2, Ws, 2, C).transpose(0, 2, 4, 1, 3, 5)
    x6 = x6.reshape(B, 4, Hs, Ws, C)              # block 2p+q holds padded pixels (2a+p, 2c+q)

    # bf16 weights for the MXU (f32 accumulation in-kernel); biases / depthwise stay f32.
    w1_bf = params["w1"].astype(jnp.bfloat16)
    w3_bf = params["w3"].astype(jnp.bfloat16)

    # Fused stages 1-3 (dropout p=0 in the module -> no-op).
    z, psum, pssq = fused_patch_merge(
        x6, w1_bf, params["b1"], params["wdw"], params["b2"], w3_bf, params["b3"],
        Ho=Ho, Wo=Wo)

    # ---- global train-mode BatchNorm2d statistics from the per-batch partial sums (f32) ----
    n = B * Ho * Wo
    total = jnp.sum(psum[:, 0, :], axis=0)
    total_sq = jnp.sum(pssq[:, 0, :], axis=0)
    mean = total / n
    var = jnp.maximum(total_sq / n - mean * mean, 0.0)      # biased variance (train-mode BN)
    # TODO(synk): E[x^2]-E[x]^2 in f32 can cancel for large activations; a shifted two-pass
    # variance is safer at production scale.
    scale = params["gamma"] * jax.lax.rsqrt(var + BN_EPS)   # (1, out_c)
    shift = params["beta"] - mean * scale                   # (1, out_c)
    # TODO(synk): BatchNorm2d running_mean/var momentum updates (training-time module state)
    # are not modeled; the output matches train-mode normalization.

    return apply_batchnorm(z, scale, shift)                 # (B, Ho*Wo, out_c) f32


# -------------------------------------- reference (pure JAX) --------------------------------------
def reference_forward(x, params, input_resolution):
    H, W = input_resolution
    B, L, C = x.shape
    h1 = jax.nn.relu(jnp.einsum("blc,ch->blh", x, params["w1"]) + params["b1"])
    h1 = h1.reshape(B, H, W, -1)
    hp = jnp.pad(h1, ((0, 0), (1, 1), (1, 1), (0, 0)))
    Ho, Wo = H // 2, W // 2
    acc = jnp.zeros((B, Ho, Wo, h1.shape[-1]), jnp.float32)
    for di in range(3):
        for dj in range(3):
            acc = acc + hp[:, di:di + 2 * Ho:2, dj:dj + 2 * Wo:2, :] * params["wdw"][di, dj]
    h2 = jax.nn.relu(acc + params["b2"])
    z = jnp.einsum("bhwc,co->bhwo", h2, params["w3"]) + params["b3"]
    mean = z.mean(axis=(0, 1, 2), keepdims=True)
    var = ((z - mean) ** 2).mean(axis=(0, 1, 2), keepdims=True)
    zn = (z - mean) * jax.lax.rsqrt(var + BN_EPS) * params["gamma"].reshape(1, 1, 1, -1) \
         + params["beta"].reshape(1, 1, 1, -1)
    return zn.reshape(B, Ho * Wo, -1)


# -------------------------------------- parameter init --------------------------------------
def init_params(key, dim, ratio=4.0):
    hidden = int(2 * dim * ratio)
    out_c = 2 * dim
    ks = jax.random.split(key, 6)

    def rnd(k, shape, scale):
        return jax.random.normal(k, shape, jnp.float32) * scale

    return dict(
        w1=rnd(ks[0], (dim, hidden), 1.0 / math.sqrt(dim)),        # conv1 1x1 (C -> hidden)
        b1=rnd(ks[1], (1, hidden), 0.02),
        wdw=rnd(ks[2], (3, 3, hidden), 1.0 / 3.0),                 # depthwise 3x3
        b2=rnd(ks[3], (1, hidden), 0.02),
        w3=rnd(ks[4], (hidden, out_c), 1.0 / math.sqrt(hidden)),   # conv3 1x1 (hidden -> 2*dim)
        b3=rnd(ks[5], (1, out_c), 0.02),
        gamma=jnp.ones((1, out_c), jnp.float32),                   # BatchNorm2d default init
        beta=jnp.zeros((1, out_c), jnp.float32),
    )


if __name__ == "__main__":
    H = W = 16
    dim = 4          # -> hidden = int(2*dim*4.0) = 32, out_c = 2*dim = 8
    B = 2

    key = jax.random.PRNGKey(0)
    kx, kp = jax.random.split(key)
    x = jax.random.normal(kx, (B, H * W, dim), jnp.float32)   # (B, H*W, C) as the module expects
    params = init_params(kp, dim, ratio=4.0)

    fwd = jax.jit(patch_merging_forward, static_argnums=2)
    out = jax.block_until_ready(fwd(x, params, (H, W)))
    assert out.shape == (B, (H // 2) * (W // 2), 2 * dim), out.shape

    ref = jax.block_until_ready(reference_forward(x, params, (H, W)))
    # bf16 MXU operands + bf16 z staging vs. the pure-f32 reference -> slightly looser tolerance.
    np.testing.assert_allclose(np.asarray(out), np.asarray(ref), atol=5e-2, rtol=5e-2)

    print("KERNEL_OK")
</pallas_src>

<mosaic_0001>
module attributes {stable_mosaic.version = 11 : i64} {
  func.func @bn_apply_kernel(%arg0: i32, %arg1: memref<128x8xbf16, #tpu.memory_space<vmem>>, %arg2: memref<1x8xf32, #tpu.memory_space<vmem>>, %arg3: memref<1x8xf32, #tpu.memory_space<vmem>>, %arg4: memref<128x8xf32, #tpu.memory_space<vmem>>) attributes {dimension_semantics = [#tpu.dimension_semantics<parallel>], iteration_bounds = array<i64: 1>, scalar_prefetch = 0 : i64, scratch_operands = 0 : i64, tpu.core_type = #tpu.core_type<tc>, window_params = [{transform_indices = @transform_0, window_bounds = array<i64: 128, 8>}, {pipeline_mode = #tpu.pipeline_mode<synchronous>, transform_indices = @transform_1, window_bounds = array<i64: 1, 8>}, {pipeline_mode = #tpu.pipeline_mode<synchronous>, transform_indices = @transform_2, window_bounds = array<i64: 1, 8>}, {transform_indices = @transform_3, window_bounds = array<i64: 128, 8>}]} {
    %c0 = arith.constant 0 : index
    %c0_0 = arith.constant 0 : index
    %0 = vector.load %arg1[%c0, %c0_0] : memref<128x8xbf16, #tpu.memory_space<vmem>>, vector<128x8xbf16>
    %1 = arith.extf %0 : vector<128x8xbf16> to vector<128x8xf32>
    %c0_1 = arith.constant 0 : index
    %c0_2 = arith.constant 0 : index
    %2 = vector.load %arg2[%c0_1, %c0_2] : memref<1x8xf32, #tpu.memory_space<vmem>>, vector<1x8xf32>
    %3 = vector.broadcast %2 : vector<1x8xf32> to vector<128x8xf32>
    %4 = arith.mulf %1, %3 : vector<128x8xf32>
    %c0_3 = arith.constant 0 : index
    %c0_4 = arith.constant 0 : index
    %5 = vector.load %arg3[%c0_3, %c0_4] : memref<1x8xf32, #tpu.memory_space<vmem>>, vector<1x8xf32>
    %6 = vector.broadcast %5 : vector<1x8xf32> to vector<128x8xf32>
    %7 = arith.addf %4, %6 : vector<128x8xf32>
    %c0_5 = arith.constant 0 : index
    %c0_6 = arith.constant 0 : index
    %8 = vector.load %arg4[%c0_5, %c0_6] : memref<128x8xf32, #tpu.memory_space<vmem>>, vector<128x8xf32>
    tpu.vector_store %arg4[%c0_5, %c0_6], %7 {strides = array<i32>} : memref<128x8xf32, #tpu.memory_space<vmem>>, vector<128x8xf32>,
    return
  }
  func.func @transform_0(%arg0: i32) -> (i32, i32) {
    %c0_i32 = arith.constant 0 : i32
    %c0_i32_0 = arith.constant 0 : i32
    return %arg0, %c0_i32 : i32, i32
  }
  func.func @transform_1(%arg0: i32) -> (i32, i32) {
    %c0_i32 = arith.constant 0 : i32
    %c0_i32_0 = arith.constant 0 : i32
    %c0_i32_1 = arith.constant 0 : i32
    return %c0_i32, %c0_i32_0 : i32, i32
  }
  func.func @transform_2(%arg0: i32) -> (i32, i32) {
    %c0_i32 = arith.constant 0 : i32
    %c0_i32_0 = arith.constant 0 : i32
    %c0_i32_1 = arith.constant 0 : i32
    return %c0_i32, %c0_i32_0 : i32, i32
  }
  func.func @transform_3(%arg0: i32) -> (i32, i32) {
    %c0_i32 = arith.constant 0 : i32
    %c0_i32_0 = arith.constant 0 : i32
    return %arg0, %c0_i32 : i32, i32
  }
}

module attributes {stable_mosaic.version = 11 : i64} {
  func.func @fused_merge_kernel(%arg0: i32, %arg1: memref<1x4x9x16x4xf32, #tpu.memory_space<vmem>>, %arg2: memref<4x32xbf16, #tpu.memory_space<vmem>>, %arg3: memref<1x32xf32, #tpu.memory_space<vmem>>, %arg4: memref<3x3x32xf32, #tpu.memory_space<vmem>>, %arg5: memref<1x32xf32, #tpu.memory_space<vmem>>, %arg6: memref<32x8xbf16, #tpu.memory_space<vmem>>, %arg7: memref<1x8xf32, #tpu.memory_space<vmem>>, %arg8: memref<1x64x8xbf16, #tpu.memory_space<vmem>>, %arg9: memref<1x1x8xf32, #tpu.memory_space<vmem>>, %arg10: memref<1x1x8xf32, #tpu.memory_space<vmem>>) attributes {dimension_semantics = [#tpu.dimension_semantics<parallel>], iteration_bounds = array<i64: 2>, scalar_prefetch = 0 : i64, scratch_operands = 0 : i64, tpu.core_type = #tpu.core_type<tc>, window_params = [{transform_indices = @transform_0, window_bounds = array<i64: 1, 4, 9, 16, 4>}, {pipeline_mode = #tpu.pipeline_mode<synchronous>, transform_indices = @transform_1, window_bounds = array<i64: 4, 32>}, {pipeline_mode = #tpu.pipeline_mode<synchronous>, transform_indices = @transform_2, window_bounds = array<i64: 1, 32>}, {pipeline_mode = #tpu.pipeline_mode<synchronous>, transform_indices = @transform_3, window_bounds = array<i64: 3, 3, 32>}, {pipeline_mode = #tpu.pipeline_mode<synchronous>, transform_indices = @transform_4, window_bounds = array<i64: 1, 32>}, {pipeline_mode = #tpu.pipeline_mode<synchronous>, transform_indices = @transform_5, window_bounds = array<i64: 32, 8>}, {pipeline_mode = #tpu.pipeline_mode<synchronous>, transform_indices = @transform_6, window_bounds = array<i64: 1, 8>}, {transform_indices = @transform_7, window_bounds = array<i64: 1, 64, 8>}, {transform_indices = @transform_8, window_bounds = array<i64: 1, 1, 8>}, {transform_indices = @transform_9, window_bounds = array<i64: 1, 1, 8>}]} {
    %c0 = arith.constant 0 : index
    %c0_0 = arith.constant 0 : index
    %0 = vector.load %arg3[%c0, %c0_0] : memref<1x32xf32, #tpu.memory_space<vmem>>, vector<1x32xf32>
    %c0_1 = arith.constant 0 : index
    %c0_2 = arith.constant 0 : index
    %1 = vector.load %arg5[%c0_1, %c0_2] : memref<1x32xf32, #tpu.memory_space<vmem>>, vector<1x32xf32>
    %c0_3 = arith.constant 0 : index
    %c0_4 = arith.constant 0 : index
    %2 = vector.load %arg7[%c0_3, %c0_4] : memref<1x8xf32, #tpu.memory_space<vmem>>, vector<1x8xf32>
    %c0_5 = arith.constant 0 : index
    %c0_6 = arith.constant 0 : index
    %c0_7 = arith.constant 0 : index
    %c0_8 = arith.constant 0 : index
    %c0_9 = arith.constant 0 : index
    %3 = vector.load %arg1[%c0_5, %c0_6, %c0_7, %c0_8, %c0_9] : memref<1x4x9x16x4xf32, #tpu.memory_space<vmem>>, vector<1x4x9x16x4xf32>
    %4 = vector.shape_cast %3 : vector<1x4x9x16x4xf32> to vector<4x9x16x4xf32>
    %5 = vector.shape_cast %4 : vector<4x9x16x4xf32> to vector<576x4xf32>
    %6 = arith.truncf %5 : vector<576x4xf32> to vector<576x4xbf16>
    %c0_10 = arith.constant 0 : index
    %c0_11 = arith.constant 0 : index
    %7 = vector.load %arg2[%c0_10, %c0_11] : memref<4x32xbf16, #tpu.memory_space<vmem>>, vector<4x32xbf16>
    %cst = arith.constant dense<0.000000e+00> : vector<576x32xf32>
    %8 = tpu.matmul %6, %7, %cst {dimension_numbers = #tpu.dot_dimension_numbers<[1], [0], [0], [1], [0, 0, 1, 1], [], []>} : vector<576x4xbf16>, vector<4x32xbf16>, vector<576x32xf32> -> vector<576x32xf32>
    %9 = vector.shape_cast %8 : vector<576x32xf32> to vector<4x9x16x32xf32>
    %10 = tpu.iota {dimensions = array<i32: 0>} : vector<9x16x1xi32>
    %11 = tpu.iota {dimensions = array<i32: 1>} : vector<9x16x1xi32>
    %cst_12 = arith.constant 0.000000e+00 : f32
    %12 = vector.broadcast %cst_12 : f32 to vector<8x8x32xf32>
    %c1_i32 = arith.constant 1 : i32
    %13 = vector.broadcast %c1_i32 : i32 to vector<9x16x1xi32>
    %14 = arith.cmpi sge, %10, %13 : vector<9x16x1xi32>
    %c8_i32 = arith.constant 8 : i32
    %15 = vector.broadcast %c8_i32 : i32 to vector<9x16x1xi32>
    %16 = arith.cmpi sle, %10, %15 : vector<9x16x1xi32>
    %17 = arith.andi %14, %16 : vector<9x16x1xi1>
    %c1_i32_13 = arith.constant 1 : i32
    %18 = vector.broadcast %c1_i32_13 : i32 to vector<9x16x1xi32>
    %19 = arith.cmpi sge, %11, %18 : vector<9x16x1xi32>
    %20 = arith.andi %17, %19 : vector<9x16x1xi1>
    %c8_i32_14 = arith.constant 8 : i32
    %21 = vector.broadcast %c8_i32_14 : i32 to vector<9x16x1xi32>
    %22 = arith.cmpi sle, %11, %21 : vector<9x16x1xi32>
    %23 = arith.andi %20, %22 : vector<9x16x1xi1>
    %24 = vector.extract_strided_slice %9 {offsets = [0, 0, 0, 0], sizes = [1, 9, 16, 32], strides = [1, 1, 1, 1]} : vector<4x9x16x32xf32> to vector<1x9x16x32xf32>
    %25 = vector.shape_cast %24 : vector<1x9x16x32xf32> to vector<9x16x32xf32>
    %26 = vector.shape_cast %0 : vector<1x32xf32> to vector<1x1x32xf32>
    %27 = vector.broadcast %26 : vector<1x1x32xf32> to vector<9x16x32xf32>
    %28 = arith.addf %25, %27 : vector<9x16x32xf32>
    %cst_15 = arith.constant 0.000000e+00 : f32
    %29 = vector.broadcast %cst_15 : f32 to vector<9x16x32xf32>
    %30 = arith.maximumf %28, %29 : vector<9x16x32xf32>
    %cst_16 = arith.constant 0.000000e+00 : f32
    %31 = vector.shape_cast %23 : vector<9x16x1xi1> to vector<9x16x1xi1>
    %32 = vector.broadcast %31 : vector<9x16x1xi1> to vector<9x16x32xi1>
    %33 = vector.broadcast %cst_16 : f32 to vector<9x16x32xf32>
    %34 = arith.select %32, %30, %33 : vector<9x16x32xi1>, vector<9x16x32xf32>
    %35 = vector.extract_strided_slice %34 {offsets = [0, 0, 0], sizes = [8, 8, 32], strides = [1, 1, 1]} : vector<9x16x32xf32> to vector<8x8x32xf32>
    %c0_17 = arith.constant 0 : index
    %c0_18 = arith.constant 0 : index
    %c0_19 = arith.constant 0 : index
    %36 = vector.load %arg4[%c0_17, %c0_18, %c0_19] : memref<3x3x32xf32, #tpu.memory_space<vmem>>, vector<1x1x32xf32>
    %37 = vector.shape_cast %36 : vector<1x1x32xf32> to vector<32xf32>
    %38 = vector.shape_cast %37 : vector<32xf32> to vector<1x1x32xf32>
    %39 = vector.broadcast %38 : vector<1x1x32xf32> to vector<8x8x32xf32>
    %40 = arith.mulf %35, %39 : vector<8x8x32xf32>
    %41 = vector.extract_strided_slice %34 {offsets = [0, 1, 0], sizes = [8, 8, 32], strides = [1, 1, 1]} : vector<9x16x32xf32> to vector<8x8x32xf32>
    %c0_20 = arith.constant 0 : index
    %c2 = arith.constant 2 : index
    %c0_21 = arith.constant 0 : index
    %42 = vector.load %arg4[%c0_20, %c2, %c0_21] : memref<3x3x32xf32, #tpu.memory_space<vmem>>, vector<1x1x32xf32>
    %43 = vector.shape_cast %42 : vector<1x1x32xf32> to vector<32xf32>
    %44 = vector.shape_cast %43 : vector<32xf32> to vector<1x1x32xf32>
    %45 = vector.broadcast %44 : vector<1x1x32xf32> to vector<8x8x32xf32>
    %46 = arith.mulf %41, %45 : vector<8x8x32xf32>
    %47 = arith.addf %40, %46 : vector<8x8x32xf32>
    %48 = vector.extract_strided_slice %34 {offsets = [1, 0, 0], sizes = [8, 8, 32], strides = [1, 1, 1]} : vector<9x16x32xf32> to vector<8x8x32xf32>
    %c2_22 = arith.constant 2 : index
    %c0_23 = arith.constant 0 : index
    %c0_24 = arith.constant 0 : index
    %49 = vector.load %arg4[%c2_22, %c0_23, %c0_24] : memref<3x3x32xf32, #tpu.memory_space<vmem>>, vector<1x1x32xf32>
    %50 = vector.shape_cast %49 : vector<1x1x32xf32> to vector<32xf32>
    %51 = vector.shape_cast %50 : vector<32xf32> to vector<1x1x32xf32>
    %52 = vector.broadcast %51 : vector<1x1x32xf32> to vector<8x8x32xf32>
    %53 = arith.mulf %48, %52 : vector<8x8x32xf32>
    %54 = arith.addf %47, %53 : vector<8x8x32xf32>
    %55 = vector.extract_strided_slice %34 {offsets = [1, 1, 0], sizes = [8, 8, 32], strides = [1, 1, 1]} : vector<9x16x32xf32> to vector<8x8x32xf32>
    %c2_25 = arith.constant 2 : index
    %c2_26 = arith.constant 2 : index
    %c0_27 = arith.constant 0 : index
    %56 = vector.load %arg4[%c2_25, %c2_26, %c0_27] : memref<3x3x32xf32, #tpu.memory_space<vmem>>, vector<1x1x32xf32>
    %57 = vector.shape_cast %56 : vector<1x1x32xf32> to vector<32xf32>
    %58 = vector.shape_cast %57 : vector<32xf32> to vector<1x1x32xf32>
    %59 = vector.broadcast %58 : vector<1x1x32xf32> to vector<8x8x32xf32>
    %60 = arith.mulf %55, %59 : vector<8x8x32xf32>
    %61 = arith.addf %54, %60 : vector<8x8x32xf32>
    %62 = arith.addf %12, %61 : vector<8x8x32xf32>
    %c1_i32_28 = arith.constant 1 : i32
    %63 = vector.broadcast %c1_i32_28 : i32 to vector<9x16x1xi32>
    %64 = arith.cmpi sge, %10, %63 : vector<9x16x1xi32>
    %c8_i32_29 = arith.constant 8 : i32
    %65 = vector.broadcast %c8_i32_29 : i32 to vector<9x16x1xi32>
    %66 = arith.cmpi sle, %10, %65 : vector<9x16x1xi32>
    %67 = arith.andi %64, %66 : vector<9x16x1xi1>
    %c0_i32 = arith.constant 0 : i32
    %68 = vector.broadcast %c0_i32 : i32 to vector<9x16x1xi32>
    %69 = arith.cmpi sge, %11, %68 : vector<9x16x1xi32>
    %70 = arith.andi %67, %69 : vector<9x16x1xi1>
    %c7_i32 = arith.constant 7 : i32
    %71 = vector.broadcast %c7_i32 : i32 to vector<9x16x1xi32>
    %72 = arith.cmpi sle, %11, %71 : vector<9x16x1xi32>
    %73 = arith.andi %70, %72 : vector<9x16x1xi1>
    %74 = vector.extract_strided_slice %9 {offsets = [1, 0, 0, 0], sizes = [1, 9, 16, 32], strides = [1, 1, 1, 1]} : vector<4x9x16x32xf32> to vector<1x9x16x32xf32>
    %75 = vector.shape_cast %74 : vector<1x9x16x32xf32> to vector<9x16x32xf32>
    %76 = vector.shape_cast %0 : vector<1x32xf32> to vector<1x1x32xf32>
    %77 = vector.broadcast %76 : vector<1x1x32xf32> to vector<9x16x32xf32>
    %78 = arith.addf %75, %77 : vector<9x16x32xf32>
    %cst_30 = arith.constant 0.000000e+00 : f32
    %79 = vector.broadcast %cst_30 : f32 to vector<9x16x32xf32>
    %80 = arith.maximumf %78, %79 : vector<9x16x32xf32>
    %cst_31 = arith.constant 0.000000e+00 : f32
    %81 = vector.shape_cast %73 : vector<9x16x1xi1> to vector<9x16x1xi1>
    %82 = vector.broadcast %81 : vector<9x16x1xi1> to vector<9x16x32xi1>
    %83 = vector.broadcast %cst_31 : f32 to vector<9x16x32xf32>
    %84 = arith.select %82, %80, %83 : vector<9x16x32xi1>, vector<9x16x32xf32>
    %85 = vector.extract_strided_slice %84 {offsets = [0, 0, 0], sizes = [8, 8, 32], strides = [1, 1, 1]} : vector<9x16x32xf32> to vector<8x8x32xf32>
    %c0_32 = arith.constant 0 : index
    %c1 = arith.constant 1 : index
    %c0_33 = arith.constant 0 : index
    %86 = vector.load %arg4[%c0_32, %c1, %c0_33] : memref<3x3x32xf32, #tpu.memory_space<vmem>>, vector<1x1x32xf32>
    %87 = vector.shape_cast %86 : vector<1x1x32xf32> to vector<32xf32>
    %88 = vector.shape_cast %87 : vector<32xf32> to vector<1x1x32xf32>
    %89 = vector.broadcast %88 : vector<1x1x32xf32> to vector<8x8x32xf32>
    %90 = arith.mulf %85, %89 : vector<8x8x32xf32>
    %91 = vector.extract_strided_slice %84 {offsets = [1, 0, 0], sizes = [8, 8, 32], strides = [1, 1, 1]} : vector<9x16x32xf32> to vector<8x8x32xf32>
    %c2_34 = arith.constant 2 : index
    %c1_35 = arith.constant 1 : index
    %c0_36 = arith.constant 0 : index
    %92 = vector.load %arg4[%c2_34, %c1_35, %c0_36] : memref<3x3x32xf32, #tpu.memory_space<vmem>>, vector<1x1x32xf32>
    %93 = vector.shape_cast %92 : vector<1x1x32xf32> to vector<32xf32>
    %94 = vector.shape_cast %93 : vector<32xf32> to vector<1x1x32xf32>
    %95 = vector.broadcast %94 : vector<1x1x32xf32> to vector<8x8x32xf32>
    %96 = arith.mulf %91, %95 : vector<8x8x32xf32>
    %97 = arith.addf %90, %96 : vector<8x8x32xf32>
    %98 = arith.addf %62, %97 : vector<8x8x32xf32>
    %c0_i32_37 = arith.constant 0 : i32
    %99 = vector.broadcast %c0_i32_37 : i32 to vector<9x16x1xi32>
    %100 = arith.cmpi sge, %10, %99 : vector<9x16x1xi32>
    %c7_i32_38 = arith.constant 7 : i32
    %101 = vector.broadcast %c7_i32_38 : i32 to vector<9x16x1xi32>
    %102 = arith.cmpi sle, %10, %101 : vector<9x16x1xi32>
    %103 = arith.andi %100, %102 : vector<9x16x1xi1>
    %c1_i32_39 = arith.constant 1 : i32
    %104 = vector.broadcast %c1_i32_39 : i32 to vector<9x16x1xi32>
    %105 = arith.cmpi sge, %11, %104 : vector<9x16x1xi32>
    %106 = arith.andi %103, %105 : vector<9x16x1xi1>
    %c8_i32_40 = arith.constant 8 : i32
    %107 = vector.broadcast %c8_i32_40 : i32 to vector<9x16x1xi32>
    %108 = arith.cmpi sle, %11, %107 : vector<9x16x1xi32>
    %109 = arith.andi %106, %108 : vector<9x16x1xi1>
    %110 = vector.extract_strided_slice %9 {offsets = [2, 0, 0, 0], sizes = [1, 9, 16, 32], strides = [1, 1, 1, 1]} : vector<4x9x16x32xf32> to vector<1x9x16x32xf32>
    %111 = vector.shape_cast %110 : vector<1x9x16x32xf32> to vector<9x16x32xf32>
    %112 = vector.shape_cast %0 : vector<1x32xf32> to vector<1x1x32xf32>
    %113 = vector.broadcast %112 : vector<1x1x32xf32> to vector<9x16x32xf32>
    %114 = arith.addf %111, %113 : vector<9x16x32xf32>
    %cst_41 = arith.constant 0.000000e+00 : f32
    %115 = vector.broadcast %cst_41 : f32 to vector<9x16x32xf32>
    %116 = arith.maximumf %114, %115 : vector<9x16x32xf32>
    %cst_42 = arith.constant 0.000000e+00 : f32
    %117 = vector.shape_cast %109 : vector<9x16x1xi1> to vector<9x16x1xi1>
    %118 = vector.broadcast %117 : vector<9x16x1xi1> to vector<9x16x32xi1>
    %119 = vector.broadcast %cst_42 : f32 to vector<9x16x32xf32>
    %120 = arith.select %118, %116, %119 : vector<9x16x32xi1>, vector<9x16x32xf32>
    %121 = vector.extract_strided_slice %120 {offsets = [0, 0, 0], sizes = [8, 8, 32], strides = [1, 1, 1]} : vector<9x16x32xf32> to vector<8x8x32xf32>
    %c1_43 = arith.constant 1 : index
    %c0_44 = arith.constant 0 : index
    %c0_45 = arith.constant 0 : index
    %122 = vector.load %arg4[%c1_43, %c0_44, %c0_45] : memref<3x3x32xf32, #tpu.memory_space<vmem>>, vector<1x1x32xf32>
    %123 = vector.shape_cast %122 : vector<1x1x32xf32> to vector<32xf32>
    %124 = vector.shape_cast %123 : vector<32xf32> to vector<1x1x32xf32>
    %125 = vector.broadcast %124 : vector<1x1x32xf32> to vector<8x8x32xf32>
    %126 = arith.mulf %121, %125 : vector<8x8x32xf32>
    %127 = vector.extract_strided_slice %120 {offsets = [0, 1, 0], sizes = [8, 8, 32], strides = [1, 1, 1]} : vector<9x16x32xf32> to vector<8x8x32xf32>
    %c1_46 = arith.constant 1 : index
    %c2_47 = arith.constant 2 : index
    %c0_48 = arith.constant 0 : index
    %128 = vector.load %arg4[%c1_46, %c2_47, %c0_48] : memref<3x3x32xf32, #tpu.memory_space<vmem>>, vector<1x1x32xf32>
    %129 = vector.shape_cast %128 : vector<1x1x32xf32> to vector<32xf32>
    %130 = vector.shape_cast %129 : vector<32xf32> to vector<1x1x32xf32>
    %131 = vector.broadcast %130 : vector<1x1x32xf32> to vector<8x8x32xf32>
    %132 = arith.mulf %127, %131 : vector<8x8x32xf32>
    %133 = arith.addf %126, %132 : vector<8x8x32xf32>
    %134 = arith.addf %98, %133 : vector<8x8x32xf32>
    %c0_i32_49 = arith.constant 0 : i32
    %135 = vector.broadcast %c0_i32_49 : i32 to vector<9x16x1xi32>
    %136 = arith.cmpi sge, %10, %135 : vector<9x16x1xi32>
    %c7_i32_50 = arith.constant 7 : i32
    %137 = vector.broadcast %c7_i32_50 : i32 to vector<9x16x1xi32>
    %138 = arith.cmpi sle, %10, %137 : vector<9x16x1xi32>
    %139 = arith.andi %136, %138 : vector<9x16x1xi1>
    %c0_i32_51 = arith.constant 0 : i32
    %140 = vector.broadcast %c0_i32_51 : i32 to vector<9x16x1xi32>
    %141 = arith.cmpi sge, %11, %140 : vector<9x16x1xi32>
    %142 = arith.andi %139, %141 : vector<9x16x1xi1>
    %c7_i32_52 = arith.constant 7 : i32
    %143 = vector.broadcast %c7_i32_52 : i32 to vector<9x16x1xi32>
    %144 = arith.cmpi sle, %11, %143 : vector<9x16x1xi32>
    %145 = arith.andi %142, %144 : vector<9x16x1xi1>
    %146 = vector.extract_strided_slice %9 {offsets = [3, 0, 0, 0], sizes = [1, 9, 16, 32], strides = [1, 1, 1, 1]} : vector<4x9x16x32xf32> to vector<1x9x16x32xf32>
    %147 = vector.shape_cast %146 : vector<1x9x16x32xf32> to vector<9x16x32xf32>
    %148 = vector.shape_cast %0 : vector<1x32xf32> to vector<1x1x32xf32>
    %149 = vector.broadcast %148 : vector<1x1x32xf32> to vector<9x16x32xf32>
    %150 = arith.addf %147, %149 : vector<9x16x32xf32>
    %cst_53 = arith.constant 0.000000e+00 : f32
    %151 = vector.broadcast %cst_53 : f32 to vector<9x16x32xf32>
    %152 = arith.maximumf %150, %151 : vector<9x16x32xf32>
    %cst_54 = arith.constant 0.000000e+00 : f32
    %153 = vector.shape_cast %145 : vector<9x16x1xi1> to vector<9x16x1xi1>
    %154 = vector.broadcast %153 : vector<9x16x1xi1> to vector<9x16x32xi1>
    %155 = vector.broadcast %cst_54 : f32 to vector<9x16x32xf32>
    %156 = arith.select %154, %152, %155 : vector<9x16x32xi1>, vector<9x16x32xf32>
    %157 = vector.extract_strided_slice %156 {offsets = [0, 0, 0], sizes = [8, 8, 32], strides = [1, 1, 1]} : vector<9x16x32xf32> to vector<8x8x32xf32>
    %c1_55 = arith.constant 1 : index
    %c1_56 = arith.constant 1 : index
    %c0_57 = arith.constant 0 : index
    %158 = vector.load %arg4[%c1_55, %c1_56, %c0_57] : memref<3x3x32xf32, #tpu.memory_space<vmem>>, vector<1x1x32xf32>
    %159 = vector.shape_cast %158 : vector<1x1x32xf32> to vector<32xf32>
    %160 = vector.shape_cast %159 : vector<32xf32> to vector<1x1x32xf32>
    %161 = vector.broadcast %160 : vector<1x1x32xf32> to vector<8x8x32xf32>
    %162 = arith.mulf %157, %161 : vector<8x8x32xf32>
    %163 = arith.addf %134, %162 : vector<8x8x32xf32>
    %164 = vector.shape_cast %1 : vector<1x32xf32> to vector<1x1x32xf32>
    %165 = vector.broadcast %164 : vector<1x1x32xf32> to vector<8x8x32xf32>
    %166 = arith.addf %163, %165 : vector<8x8x32xf32>
    %cst_58 = arith.constant 0.000000e+00 : f32
    %167 = vector.broadcast %cst_58 : f32 to vector<8x8x32xf32>
    %168 = arith.maximumf %166, %167 : vector<8x8x32xf32>
    %169 = vector.shape_cast %168 : vector<8x8x32xf32> to vector<64x32xf32>
    %170 = arith.truncf %169 : vector<64x32xf32> to vector<64x32xbf16>
    %c0_59 = arith.constant 0 : index
    %c0_60 = arith.constant 0 : index
    %171 = vector.load %arg6[%c0_59, %c0_60] : memref<32x8xbf16, #tpu.memory_space<vmem>>, vector<32x8xbf16>
    %cst_61 = arith.constant dense<0.000000e+00> : vector<64x8xf32>
    %172 = tpu.matmul %170, %171, %cst_61 {dimension_numbers = #tpu.dot_dimension_numbers<[1], [0], [0], [1], [0, 0, 1, 1], [], []>} : vector<64x32xbf16>, vector<32x8xbf16>, vector<64x8xf32> -> vector<64x8xf32>
    %173 = vector.broadcast %2 : vector<1x8xf32> to vector<64x8xf32>
    %174 = arith.addf %172, %173 : vector<64x8xf32>
    %cst_62 = arith.constant dense<0.000000e+00> : vector<8xf32>
    %175 = vector.multi_reduction <add>, %174, %cst_62 [0] : vector<64x8xf32> to vector<8xf32>
    %176 = vector.shape_cast %175 : vector<8xf32> to vector<1x8xf32>
    %c0_63 = arith.constant 0 : index
    %c0_64 = arith.constant 0 : index
    %c0_65 = arith.constant 0 : index
    %177 = vector.load %arg9[%c0_63, %c0_64, %c0_65] : memref<1x1x8xf32, #tpu.memory_space<vmem>>, vector<1x1x8xf32>
    %178 = vector.shape_cast %177 : vector<1x1x8xf32> to vector<1x8xf32>
    %179 = vector.shape_cast %176 : vector<1x8xf32> to vector<1x1x8xf32>
    tpu.vector_store %arg9[%c0_63, %c0_64, %c0_65], %179 {strides = array<i32>} : memref<1x1x8xf32, #tpu.memory_space<vmem>>, vector<1x1x8xf32>,
    %180 = arith.mulf %174, %174 : vector<64x8xf32>
    %cst_66 = arith.constant dense<0.000000e+00> : vector<8xf32>
    %181 = vector.multi_reduction <add>, %180, %cst_66 [0] : vector<64x8xf32> to vector<8xf32>
    %182 = vector.shape_cast %181 : vector<8xf32> to vector<1x8xf32>
    %c0_67 = arith.constant 0 : index
    %c0_68 = arith.constant 0 : index
    %c0_69 = arith.constant 0 : index
    %183 = vector.load %arg10[%c0_67, %c0_68, %c0_69] : memref<1x1x8xf32, #tpu.memory_space<vmem>>, vector<1x1x8xf32>
    %184 = vector.shape_cast %183 : vector<1x1x8xf32> to vector<1x8xf32>
    %185 = vector.shape_cast %182 : vector<1x8xf32> to vector<1x1x8xf32>
    tpu.vector_store %arg10[%c0_67, %c0_68, %c0_69], %185 {strides = array<i32>} : memref<1x1x8xf32, #tpu.memory_space<vmem>>, vector<1x1x8xf32>,
    %186 = arith.truncf %174 : vector<64x8xf32> to vector<64x8xbf16>
    %c0_70 = arith.constant 0 : index
    %c0_71 = arith.constant 0 : index
    %c0_72 = arith.constant 0 : index
    %187 = vector.load %arg8[%c0_70, %c0_71, %c0_72] : memref<1x64x8xbf16, #tpu.memory_space<vmem>>, vector<1x64x8xbf16>
    %188 = vector.shape_cast %187 : vector<1x64x8xbf16> to vector<64x8xbf16>
    %189 = vector.shape_cast %186 : vector<64x8xbf16> to vector<1x64x8xbf16>
    tpu.vector_store %arg8[%c0_70, %c0_71, %c0_72], %189 {strides = array<i32>} : memref<1x64x8xbf16, #tpu.memory_space<vmem>>, vector<1x64x8xbf16>,
    return
  }
  func.func @transform_0(%arg0: i32) -> (i32, i32, i32, i32, i32) {
    %c0_i32 = arith.constant 0 : i32
    %c0_i32_0 = arith.constant 0 : i32
    %c0_i32_1 = arith.constant 0 : i32
    %c0_i32_2 = arith.constant 0 : i32
    %c0_i32_3 = arith.constant 0 : i32
    return %arg0, %c0_i32, %c0_i32_0, %c0_i32_1, %c0_i32_2 : i32, i32, i32, i32, i32
  }
  func.func @transform_1(%arg0: i32) -> (i32, i32) {
    %c0_i32 = arith.constant 0 : i32
    %c0_i32_0 = arith.constant 0 : i32
    %c0_i32_1 = arith.constant 0 : i32
    return %c0_i32, %c0_i32_0 : i32, i32
  }
  func.func @transform_2(%arg0: i32) -> (i32, i32) {
    %c0_i32 = arith.constant 0 : i32
    %c0_i32_0 = arith.constant 0 : i32
    %c0_i32_1 = arith.constant 0 : i32
    return %c0_i32, %c0_i32_0 : i32, i32
  }
  func.func @transform_3(%arg0: i32) -> (i32, i32, i32) {
    %c0_i32 = arith.constant 0 : i32
    %c0_i32_0 = arith.constant 0 : i32
    %c0_i32_1 = arith.constant 0 : i32
    %c0_i32_2 = arith.constant 0 : i32
    return %c0_i32, %c0_i32_0, %c0_i32_1 : i32, i32, i32
  }
  func.func @transform_4(%arg0: i32) -> (i32, i32) {
    %c0_i32 = arith.constant 0 : i32
    %c0_i32_0 = arith.constant 0 : i32
    %c0_i32_1 = arith.constant 0 : i32
    return %c0_i32, %c0_i32_0 : i32, i32
  }
  func.func @transform_5(%arg0: i32) -> (i32, i32) {
    %c0_i32 = arith.constant 0 : i32
    %c0_i32_0 = arith.constant 0 : i32
    %c0_i32_1 = arith.constant 0 : i32
    return %c0_i32, %c0_i32_0 : i32, i32
  }
  func.func @transform_6(%arg0: i32) -> (i32, i32) {
    %c0_i32 = arith.constant 0 : i32
    %c0_i32_0 = arith.constant 0 : i32
    %c0_i32_1 = arith.constant 0 : i32
    return %c0_i32, %c0_i32_0 : i32, i32
  }
  func.func @transform_7(%arg0: i32) -> (i32, i32, i32) {
    %c0_i32 = arith.constant 0 : i32
    %c0_i32_0 = arith.constant 0 : i32
    %c0_i32_1 = arith.constant 0 : i32
    return %arg0, %c0_i32, %c0_i32_0 : i32, i32, i32
  }
  func.func @transform_8(%arg0: i32) -> (i32, i32, i32) {
    %c0_i32 = arith.constant 0 : i32
    %c0_i32_0 = arith.constant 0 : i32
    %c0_i32_1 = arith.constant 0 : i32
    return %arg0, %c0_i32, %c0_i32_0 : i32, i32, i32
  }
  func.func @transform_9(%arg0: i32) -> (i32, i32, i32) {
    %c0_i32 = arith.constant 0 : i32
    %c0_i32_0 = arith.constant 0 : i32
    %c0_i32_1 = arith.constant 0 : i32
    return %arg0, %c0_i32, %c0_i32_0 : i32, i32, i32
  }
}

</mosaic_0001>

<llo_original>
// kernel: patch_merging_forward.3
$region0: #{patch_merging_forward.3}
  #allocation0 [shape = 'u32[]', space=smem, size = 0x4, offset = 0x4, fixed_abs, tag = 'smem constant byte address 0x4 - core index']
  #allocation1 [shape = 'u32[144,128]{1,0:T(1,128)}', space=vmem, size = 0x12000, scoped, tag = 'internal scratch']
  %s0 = inlined_call_operand.vmem [shape: bf16[128,8], index: 0, kind: input, shape index: {}]
  %s1 = inlined_call_operand.vmem [shape: f32[1,8], index: 1, kind: input, shape index: {}]
  %s2 = inlined_call_operand.vmem [shape: f32[1,8], index: 2, kind: input, shape index: {}]
  %s3 = inlined_call_operand.vmem [shape: f32[128,8], index: 3, kind: output, shape index: {}]
  %s4 = sld [smem:[#allocation0]]
  $region22: #{patch_merging_forward.3} parent=0
    _
  %s6 = ssub.s32 1, %s4
  %s7 = scalar_select 0, %s6, %s4
  // Predicated region
  $region2: #{patch_merging_forward.3} parent=0 // pred_check
    _
  $region3: #{patch_merging_forward.3} parent=0 // pred_check_branch
    %9 = sbr.rel (0) target = $region5
  $region4: #{patch_merging_forward.3} parent=0 // pred_region
    _
  $region5: #{patch_merging_forward.3} parent=0 // pred_fallthru
    _
  // Predicated region
  $region6: #{patch_merging_forward.3} parent=0 // pred_check
    _
  $region7: #{patch_merging_forward.3} parent=0 // pred_check_branch
    %11 = sbr.rel (0) target = $region9
  $region8: #{patch_merging_forward.3} parent=0 // pred_region
    _
  $region9: #{patch_merging_forward.3} parent=0 // pred_fallthru
    _
  // Predicated region
  $region10: #{patch_merging_forward.3} parent=0 // pred_check
    _
  $region11: #{patch_merging_forward.3} parent=0 // pred_check_branch
    %13 = sbr.rel (0) target = $region13
  $region12: #{patch_merging_forward.3} parent=0 // pred_region
    _
  $region13: #{patch_merging_forward.3} parent=0 // pred_fallthru
    _
  %v14 = vld [vmem:[%s0] sm:$0xf]
  %v15 = vld [vmem:[%s0 + $0x4] sm:$0xf]
  %v16 = vld [vmem:[%s0 + $0x8] sm:$0xf]
  %v17 = vld [vmem:[%s0 + $0xc] sm:$0xf]
  %v18 = vld [vmem:[%s0 + $0x10] sm:$0xf]
  %v19 = vld [vmem:[%s0 + $0x14] sm:$0xf]
  %v20 = vld [vmem:[%s0 + $0x18] sm:$0xf]
  %v21 = vld [vmem:[%s0 + $0x1c] sm:$0xf]
  %v22 = vld [vmem:[%s0 + $0x20] sm:$0xf]
  %v23 = vld [vmem:[%s0 + $0x24] sm:$0xf]
  %v24 = vld [vmem:[%s0 + $0x28] sm:$0xf]
  %v25 = vld [vmem:[%s0 + $0x2c] sm:$0xf]
  %v26 = vld [vmem:[%s0 + $0x30] sm:$0xf]
  %v27 = vld [vmem:[%s0 + $0x34] sm:$0xf]
  %v28 = vld [vmem:[%s0 + $0x38] sm:$0xf]
  %v29 = vld [vmem:[%s0 + $0x3c] sm:$0xf]
  %v30 = vunpack.c.l.bf16 %v14
  %v31 = vunpack.c.l.bf16 %v15
  %v32 = vunpack.c.l.bf16 %v16
  %v33 = vunpack.c.l.bf16 %v17
  %v34 = vunpack.c.l.bf16 %v18
  %v35 = vunpack.c.l.bf16 %v19
  %v36 = vunpack.c.l.bf16 %v20
  %v37 = vunpack.c.l.bf16 %v21
  %v38 = vunpack.c.l.bf16 %v22
  %v39 = vunpack.c.l.bf16 %v23
  %v40 = vunpack.c.l.bf16 %v24
  %v41 = vunpack.c.l.bf16 %v25
  %v42 = vunpack.c.l.bf16 %v26
  %v43 = vunpack.c.l.bf16 %v27
  %v44 = vunpack.c.l.bf16 %v28
  %v45 = vunpack.c.l.bf16 %v29
  %v46 = vld [vmem:[%s1] sm:$0x1]
  %v48 = vlaneseq
  %v49 = vshrl.u32 %v48, 7
  %v50 = vsub.s32 0, %v49
  %v51 = vrot.slane %v46, %v50
  %v53 = vmul.f32 %v30, %v51
  %v54 = vmul.f32 %v31, %v51
  %v55 = vmul.f32 %v32, %v51
  %v56 = vmul.f32 %v33, %v51
  %v57 = vmul.f32 %v34, %v51
  %v58 = vmul.f32 %v35, %v51
  %v59 = vmul.f32 %v36, %v51
  %v60 = vmul.f32 %v37, %v51
  %v61 = vmul.f32 %v38, %v51
  %v62 = vmul.f32 %v39, %v51
  %v63 = vmul.f32 %v40, %v51
  %v64 = vmul.f32 %v41, %v51
  %v65 = vmul.f32 %v42, %v51
  %v66 = vmul.f32 %v43, %v51
  %v67 = vmul.f32 %v44, %v51
  %v68 = vmul.f32 %v45, %v51
  %v69 = vld [vmem:[%s2] sm:$0x1]
  %v71 = vlaneseq
  %v72 = vshrl.u32 %v71, 7
  %v73 = vsub.s32 0, %v72
  %v74 = vrot.slane %v69, %v73
  %v76 = vadd.f32 %v53, %v74
  %v77 = vadd.f32 %v54, %v74
  %v78 = vadd.f32 %v55, %v74
  %v79 = vadd.f32 %v56, %v74
  %v80 = vadd.f32 %v57, %v74
  %v81 = vadd.f32 %v58, %v74
  %v82 = vadd.f32 %v59, %v74
  %v83 = vadd.f32 %v60, %v74
  %v84 = vadd.f32 %v61, %v74
  %v85 = vadd.f32 %v62, %v74
  %v86 = vadd.f32 %v63, %v74
  %v87 = vadd.f32 %v64, %v74
  %v88 = vadd.f32 %v65, %v74
  %v89 = vadd.f32 %v66, %v74
  %v90 = vadd.f32 %v67, %v74
  %v91 = vadd.f32 %v68, %v74
  %vm92 = vcmask 64512
  %93 = vst.msk [vmem:[%s3] sm:$0xff] %vm92, %v76
  %94 = vst.msk [vmem:[%s3 + $0x8] sm:$0xff] %vm92, %v77
  %95 = vst.msk [vmem:[%s3 + $0x10] sm:$0xff] %vm92, %v78
  %96 = vst.msk [vmem:[%s3 + $0x18] sm:$0xff] %vm92, %v79
  %97 = vst.msk [vmem:[%s3 + $0x20] sm:$0xff] %vm92, %v80
  %98 = vst.msk [vmem:[%s3 + $0x28] sm:$0xff] %vm92, %v81
  %99 = vst.msk [vmem:[%s3 + $0x30] sm:$0xff] %vm92, %v82
  %100 = vst.msk [vmem:[%s3 + $0x38] sm:$0xff] %vm92, %v83
  %101 = vst.msk [vmem:[%s3 + $0x40] sm:$0xff] %vm92, %v84
  %102 = vst.msk [vmem:[%s3 + $0x48] sm:$0xff] %vm92, %v85
  %103 = vst.msk [vmem:[%s3 + $0x50] sm:$0xff] %vm92, %v86
  %104 = vst.msk [vmem:[%s3 + $0x58] sm:$0xff] %vm92, %v87
  %105 = vst.msk [vmem:[%s3 + $0x60] sm:$0xff] %vm92, %v88
  %106 = vst.msk [vmem:[%s3 + $0x68] sm:$0xff] %vm92, %v89
  %107 = vst.msk [vmem:[%s3 + $0x70] sm:$0xff] %vm92, %v90
  %108 = vst.msk [vmem:[%s3 + $0x78] sm:$0xff] %vm92, %v91
  // Predicated region
  $region14: #{patch_merging_forward.3} parent=0 // pred_check
    _
  $region15: #{patch_merging_forward.3} parent=0 // pred_check_branch
    %110 = sbr.rel (0) target = $region17
  $region16: #{patch_merging_forward.3} parent=0 // pred_region
    _
  $region17: #{patch_merging_forward.3} parent=0 // pred_fallthru
    _
  // Predicated region
  $region18: #{patch_merging_forward.3} parent=0 // pred_check
    _
  $region19: #{patch_merging_forward.3} parent=0 // pred_check_branch
    %112 = sbr.rel (0) target = $region21
  $region20: #{patch_merging_forward.3} parent=0 // pred_region
    _
  $region21: #{patch_merging_forward.3} parent=0 // pred_fallthru
    _

// kernel: patch_merging_forward.2
$region0: #{patch_merging_forward.2}
  #allocation0 [shape = 'u32[]', space=smem, size = 0x4, offset = 0x4, fixed_abs, tag = 'smem constant byte address 0x4 - core index']
  #allocation1 [shape = 'u32[144,128]{1,0:T(1,128)}', space=vmem, size = 0x12000, scoped, tag = 'internal scratch']
  %s0 = inlined_call_operand.vmem [shape: f32[2,4,9,16,4], index: 0, kind: input, shape index: {}]
  %s1 = inlined_call_operand.vmem [shape: bf16[4,32], index: 1, kind: input, shape index: {}]
  %s2 = inlined_call_operand.vmem [shape: f32[1,32], index: 2, kind: input, shape index: {}]
  %s3 = inlined_call_operand.vmem [shape: f32[3,3,32], index: 3, kind: input, shape index: {}]
  %s4 = inlined_call_operand.vmem [shape: f32[1,32], index: 4, kind: input, shape index: {}]
  %s5 = inlined_call_operand.vmem [shape: bf16[32,8], index: 5, kind: input, shape index: {}]
  %s6 = inlined_call_operand.vmem [shape: f32[1,8], index: 6, kind: input, shape index: {}]
  %s7 = inlined_call_operand.vmem [shape: bf16[2,64,8], index: 7, kind: output, shape index: {0}]
  %s8 = inlined_call_operand.vmem [shape: f32[2,1,8], index: 8, kind: output, shape index: {1}]
  %s9 = inlined_call_operand.vmem [shape: f32[2,1,8], index: 9, kind: output, shape index: {2}]
  %10 = xla_tuple %s7, %s8, %s9
  %s11 = sld [smem:[#allocation0]]
  $region77: #{patch_merging_forward.2} parent=0
    _
  %s13 = ssub.s32 1, %s11
  %s14 = scalar_select 0, %s13, %s11
  loop: start=0, step=1, limit=4
  $region2: #{patch_merging_forward.2} parent=0 // loop_pre_header
    _
  $region3: #{patch_merging_forward.2} parent=0 // loop_header
    %s16 = sphi 0, %s20
    %p17 = scmp.ge.s32.totalorder %s16, 4
    %s26 = sphi 0, %s28
    %s29 = sphi 0, %s26
    %s30 = sphi 0, %s29
    %s46 = sphi 0, %s30
    %s50 = sphi 0, %s50
    %s52 = sphi 0, %s50
    %s53 = sphi 0, %s52
    %s67 = sphi 0, %s53
    %s71 = sphi 0, %s71
    %s73 = sphi 0, %s71
    %s74 = sphi 0, %s73
    %s88 = sphi 0, %s74
    %s92 = sphi 0, %s92
    %s94 = sphi 0, %s92
    %s95 = sphi 0, %s94
    %s109 = sphi 0, %s95
    %s113 = sphi 0, %s113
    %s115 = sphi 0, %s113
    %s116 = sphi 0, %s115
    %s130 = sphi 0, %s116
    %s134 = sphi 0, %s134
    %s136 = sphi 0, %s134
    %s137 = sphi 0, %s136
    %s151 = sphi 0, %s137
    %s155 = sphi 0, %s155
    %s157 = sphi 0, %s155
    %s158 = sphi 0, %s157
    %s172 = sphi 0, %s158
    %s178 = sphi 0, %s180
    %s181 = sphi 0, %s178
    %s182 = sphi 0, %s181
    %s198 = sphi 0, %s182
    %s204 = sphi 0, %s206
    %s207 = sphi 0, %s204
    %s208 = sphi 0, %s207
    %s224 = sphi 0, %s208
    %s230 = sphi 0, %s232
    %s233 = sphi 0, %s230
    %s234 = sphi 0, %s233
    %s250 = sphi 0, %s234
  $region4: #{patch_merging_forward.2} parent=0 // loop_header_branch
    %19 = sbr.rel (%p17) target = $region8
  $region5: #{patch_merging_forward.2} parent=0 // loop_body
    %s21 = ssub.s32 %s16, 1
    %s22 = ssub.s32 %s16, 2
    %s23 = sadd.s32 %s16, 1
    %s24 = ssub.s32 %s16, %s23
    %p25 = scmp.eq.s32.totalorder %s24, 0
    %s27 = sadd.s32 %s26, 1
    %s28 = scalar_select %p25, %s26, %s27
    %p31 = pneg %p25
    %p32 = scmp.eq.s32.totalorder %s16, 1
    %p33 = por %p31, %p32
    %p34 = scmp.ne.s32.totalorder %s26, %s29
    %p35 = scmp.eq.s32.totalorder %s16, 0
    %p36 = por %p34, %p35
    %p37 = scmp.ne.s32.totalorder %s26, %s29
    %p38 = scmp.eq.s32.totalorder %s21, 1
    %p39 = por %p37, %p38
    %p40 = scmp.ne.s32.totalorder %s29, %s30
    %p41 = scmp.eq.s32.totalorder %s21, 0
    %p42 = por %p40, %p41
    %p43 = scmp.ne.s32.totalorder %s29, %s30
    %p44 = scmp.eq.s32.totalorder %s22, 1
    %p45 = por %p43, %p44
    %p47 = scmp.ne.s32.totalorder %s30, %s46
    %p48 = scmp.eq.s32.totalorder %s22, 0
    %p49 = por %p47, %p48
    %s51 = sadd.s32 %s50, 1
    %p54 = scmp.eq.s32.totalorder %s16, 1
    %p55 = scmp.ne.s32.totalorder %s50, %s52
    %p56 = scmp.eq.s32.totalorder %s16, 0
    %p57 = por %p55, %p56
    %p58 = scmp.ne.s32.totalorder %s50, %s52
    %p59 = scmp.eq.s32.totalorder %s21, 1
    %p60 = por %p58, %p59
    %p61 = scmp.ne.s32.totalorder %s52, %s53
    %p62 = scmp.eq.s32.totalorder %s21, 0
    %p63 = por %p61, %p62
    %p64 = scmp.ne.s32.totalorder %s52, %s53
    %p65 = scmp.eq.s32.totalorder %s22, 1
    %p66 = por %p64, %p65
    %p68 = scmp.ne.s32.totalorder %s53, %s67
    %p69 = scmp.eq.s32.totalorder %s22, 0
    %p70 = por %p68, %p69
    %s72 = sadd.s32 %s71, 1
    %p75 = scmp.eq.s32.totalorder %s16, 1
    %p76 = scmp.ne.s32.totalorder %s71, %s73
    %p77 = scmp.eq.s32.totalorder %s16, 0
    %p78 = por %p76, %p77
    %p79 = scmp.ne.s32.totalorder %s71, %s73
    %p80 = scmp.eq.s32.totalorder %s21, 1
    %p81 = por %p79, %p80
    %p82 = scmp.ne.s32.totalorder %s73, %s74
    %p83 = scmp.eq.s32.totalorder %s21, 0
    %p84 = por %p82, %p83
    %p85 = scmp.ne.s32.totalorder %s73, %s74
    %p86 = scmp.eq.s32.totalorder %s22, 1
    %p87 = por %p85, %p86
    %p89 = scmp.ne.s32.totalorder %s74, %s88
    %p90 = scmp.eq.s32.totalorder %s22, 0
    %p91 = por %p89, %p90
    %s93 = sadd.s32 %s92, 1
    %p96 = scmp.eq.s32.totalorder %s16, 1
    %p97 = scmp.ne.s32.totalorder %s92, %s94
    %p98 = scmp.eq.s32.totalorder %s16, 0
    %p99 = por %p97, %p98
    %p100 = scmp.ne.s32.totalorder %s92, %s94
    %p101 = scmp.eq.s32.totalorder %s21, 1
    %p102 = por %p100, %p101
    %p103 = scmp.ne.s32.totalorder %s94, %s95
    %p104 = scmp.eq.s32.totalorder %s21, 0
    %p105 = por %p103, %p104
    %p106 = scmp.ne.s32.totalorder %s94, %s95
    %p107 = scmp.eq.s32.totalorder %s22, 1
    %p108 = por %p106, %p107
    %p110 = scmp.ne.s32.totalorder %s95, %s109
    %p111 = scmp.eq.s32.totalorder %s22, 0
    %p112 = por %p110, %p111
    %s114 = sadd.s32 %s113, 1
    %p117 = scmp.eq.s32.totalorder %s16, 1
    %p118 = scmp.ne.s32.totalorder %s113, %s115
    %p119 = scmp.eq.s32.totalorder %s16, 0
    %p120 = por %p118, %p119
    %p121 = scmp.ne.s32.totalorder %s113, %s115
    %p122 = scmp.eq.s32.totalorder %s21, 1
    %p123 = por %p121, %p122
    %p124 = scmp.ne.s32.totalorder %s115, %s116
    %p125 = scmp.eq.s32.totalorder %s21, 0
    %p126 = por %p124, %p125
    %p127 = scmp.ne.s32.totalorder %s115, %s116
    %p128 = scmp.eq.s32.totalorder %s22, 1
    %p129 = por %p127, %p128
    %p131 = scmp.ne.s32.totalorder %s116, %s130
    %p132 = scmp.eq.s32.totalorder %s22, 0
    %p133 = por %p131, %p132
    %s135 = sadd.s32 %s134, 1
    %p138 = scmp.eq.s32.totalorder %s16, 1
    %p139 = scmp.ne.s32.totalorder %s134, %s136
    %p140 = scmp.eq.s32.totalorder %s16, 0
    %p141 = por %p139, %p140
    %p142 = scmp.ne.s32.totalorder %s134, %s136
    %p143 = scmp.eq.s32.totalorder %s21, 1
    %p144 = por %p142, %p143
    %p145 = scmp.ne.s32.totalorder %s136, %s137
    %p146 = scmp.eq.s32.totalorder %s21, 0
    %p147 = por %p145, %p146
    %p148 = scmp.ne.s32.totalorder %s136, %s137
    %p149 = scmp.eq.s32.totalorder %s22, 1
    %p150 = por %p148, %p149
    %p152 = scmp.ne.s32.totalorder %s137, %s151
    %p153 = scmp.eq.s32.totalorder %s22, 0
    %p154 = por %p152, %p153
    %s156 = sadd.s32 %s155, 1
    %p159 = scmp.eq.s32.totalorder %s16, 1
    %p160 = scmp.ne.s32.totalorder %s155, %s157
    %p161 = scmp.eq.s32.totalorder %s16, 0
    %p162 = por %p160, %p161
    %p163 = scmp.ne.s32.totalorder %s155, %s157
    %p164 = scmp.eq.s32.totalorder %s21, 1
    %p165 = por %p163, %p164
    %p166 = scmp.ne.s32.totalorder %s157, %s158
    %p167 = scmp.eq.s32.totalorder %s21, 0
    %p168 = por %p166, %p167
    %p169 = scmp.ne.s32.totalorder %s157, %s158
    %p170 = scmp.eq.s32.totalorder %s22, 1
    %p171 = por %p169, %p170
    %p173 = scmp.ne.s32.totalorder %s158, %s172
    %p174 = scmp.eq.s32.totalorder %s22, 0
    %p175 = por %p173, %p174
    %s176 = ssub.s32 %s16, %s23
    %p177 = scmp.eq.s32.totalorder %s176, 0
    %s179 = sadd.s32 %s178, 1
    %s180 = scalar_select %p177, %s178, %s179
    %p183 = pneg %p177
    %p184 = scmp.eq.s32.totalorder %s16, 1
    %p185 = por %p183, %p184
    %p186 = scmp.ne.s32.totalorder %s178, %s181
    %p187 = scmp.eq.s32.totalorder %s16, 0
    %p188 = por %p186, %p187
    %p189 = scmp.ne.s32.totalorder %s178, %s181
    %p190 = scmp.eq.s32.totalorder %s21, 1
    %p191 = por %p189, %p190
    %p192 = scmp.ne.s32.totalorder %s181, %s182
    %p193 = scmp.eq.s32.totalorder %s21, 0
    %p194 = por %p192, %p193
    %p195 = scmp.ne.s32.totalorder %s181, %s182
    %p196 = scmp.eq.s32.totalorder %s22, 1
    %p197 = por %p195, %p196
    %p199 = scmp.ne.s32.totalorder %s182, %s198
    %p200 = scmp.eq.s32.totalorder %s22, 0
    %p201 = por %p199, %p200
    %s202 = ssub.s32 %s16, %s23
    %p203 = scmp.eq.s32.totalorder %s202, 0
    %s205 = sadd.s32 %s204, 1
    %s206 = scalar_select %p203, %s204, %s205
    %p209 = pneg %p203
    %p210 = scmp.eq.s32.totalorder %s16, 1
    %p211 = por %p209, %p210
    %p212 = scmp.ne.s32.totalorder %s204, %s207
    %p213 = scmp.eq.s32.totalorder %s16, 0
    %p214 = por %p212, %p213
    %p215 = scmp.ne.s32.totalorder %s204, %s207
    %p216 = scmp.eq.s32.totalorder %s21, 1
    %p217 = por %p215, %p216
    %p218 = scmp.ne.s32.totalorder %s207, %s208
    %p219 = scmp.eq.s32.totalorder %s21, 0
    %p220 = por %p218, %p219
    %p221 = scmp.ne.s32.totalorder %s207, %s208
    %p222 = scmp.eq.s32.totalorder %s22, 1
    %p223 = por %p221, %p222
    %p225 = scmp.ne.s32.totalorder %s208, %s224
    %p226 = scmp.eq.s32.totalorder %s22, 0
    %p227 = por %p225, %p226
    %s228 = ssub.s32 %s16, %s23
    %p229 = scmp.eq.s32.totalorder %s228, 0
    %s231 = sadd.s32 %s230, 1
    %s232 = scalar_select %p229, %s230, %s231
    %p235 = pneg %p229
    %p236 = scmp.eq.s32.totalorder %s16, 1
    %p237 = por %p235, %p236
    %p238 = scmp.ne.s32.totalorder %s230, %s233
    %p239 = scmp.eq.s32.totalorder %s16, 0
    %p240 = por %p238, %p239
    %p241 = scmp.ne.s32.totalorder %s230, %s233
    %p242 = scmp.eq.s32.totalorder %s21, 1
    %p243 = por %p241, %p242
    %p244 = scmp.ne.s32.totalorder %s233, %s234
    %p245 = scmp.eq.s32.totalorder %s21, 0
    %p246 = por %p244, %p245
    %p247 = scmp.ne.s32.totalorder %s233, %s234
    %p248 = scmp.eq.s32.totalorder %s22, 1
    %p249 = por %p247, %p248
    %p251 = scmp.ne.s32.totalorder %s234, %s250
    %p252 = scmp.eq.s32.totalorder %s22, 0
    %p253 = por %p251, %p252
    %p254 = scmp.le.s32.totalorder 1, %s16
    %p255 = scmp.lt.s32.totalorder %s16, 3
    %p256 = pnand %p254, %p255
    %p257 = pneg %p256
    // Predicated region
    $region9: #{patch_merging_forward.2} parent=5 // pred_check
      _
    $region10: #{patch_merging_forward.2} parent=5 // pred_check_branch
      %259 = sbr.rel (%p256) target = $region12
    $region11: #{patch_merging_forward.2} parent=5 // pred_region
      %s260 = ssub.s32 %s16, 1
      // Predicated region
      $region13: #{patch_merging_forward.2} parent=11 // pred_check
        %p261 = pneg %p63
      $region14: #{patch_merging_forward.2} parent=11 // pred_check_branch
        %263 = sbr.rel (%p261) target = $region16
      $region15: #{patch_merging_forward.2} parent=11 // pred_region
        _
      $region16: #{patch_merging_forward.2} parent=11 // pred_fallthru
        _
      // Predicated region
      $region17: #{patch_merging_forward.2} parent=11 // pred_check
        %p264 = pneg %p84
      $region18: #{patch_merging_forward.2} parent=11 // pred_check_branch
        %266 = sbr.rel (%p264) target = $region20
      $region19: #{patch_merging_forward.2} parent=11 // pred_region
        _
      $region20: #{patch_merging_forward.2} parent=11 // pred_fallthru
        _
      // Predicated region
      $region21: #{patch_merging_forward.2} parent=11 // pred_check
        %p267 = pneg %p105
      $region22: #{patch_merging_forward.2} parent=11 // pred_check_branch
        %269 = sbr.rel (%p267) target = $region24
      $region23: #{patch_merging_forward.2} parent=11 // pred_region
        _
      $region24: #{patch_merging_forward.2} parent=11 // pred_fallthru
        _
      // Predicated region
      $region25: #{patch_merging_forward.2} parent=11 // pred_check
        %p270 = pneg %p126
      $region26: #{patch_merging_forward.2} parent=11 // pred_check_branch
        %272 = sbr.rel (%p270) target = $region28
      $region27: #{patch_merging_forward.2} parent=11 // pred_region
        _
      $region28: #{patch_merging_forward.2} parent=11 // pred_fallthru
        _
      // Predicated region
      $region29: #{patch_merging_forward.2} parent=11 // pred_check
        %p273 = pneg %p147
      $region30: #{patch_merging_forward.2} parent=11 // pred_check_branch
        %275 = sbr.rel (%p273) target = $region32
      $region31: #{patch_merging_forward.2} parent=11 // pred_region
        _
      $region32: #{patch_merging_forward.2} parent=11 // pred_fallthru
        _
      // Predicated region
      $region33: #{patch_merging_forward.2} parent=11 // pred_check
        %p276 = pneg %p168
      $region34: #{patch_merging_forward.2} parent=11 // pred_check_branch
        %278 = sbr.rel (%p276) target = $region36
      $region35: #{patch_merging_forward.2} parent=11 // pred_region
        _
      $region36: #{patch_merging_forward.2} parent=11 // pred_fallthru
        _
    $region12: #{patch_merging_forward.2} parent=5 // pred_fallthru
      _
    %p279 = scmp.lt.s32.totalorder %s16, 2
    // Predicated region
    $region37: #{patch_merging_forward.2} parent=5 // pred_check
      %p280 = pneg %p279
    $region38: #{patch_merging_forward.2} parent=5 // pred_check_branch
      %282 = sbr.rel (%p280) target = $region40
    $region39: #{patch_merging_forward.2} parent=5 // pred_region
      // Predicated region
      $region41: #{patch_merging_forward.2} parent=39 // pred_check
        %p283 = pneg %p36
      $region42: #{patch_merging_forward.2} parent=39 // pred_check_branch
        %285 = sbr.rel (%p283) target = $region44
      $region43: #{patch_merging_forward.2} parent=39 // pred_region
        %p286 = scmp.lt.s32.totalorder %s16, 1
        %s287 = scalar_select %p286, %s16, 1
        %s288 = smul.addr %s287, 72
        %s289 = smul.addr %s288, 8
        %s290 = scalar_lea.vmem %s0, %s289
      $region44: #{patch_merging_forward.2} parent=39 // pred_fallthru
        _
    $region40: #{patch_merging_forward.2} parent=5 // pred_fallthru
      _
    %p291 = scmp.le.s32.totalorder 1, %s16
    %p292 = scmp.lt.s32.totalorder %s16, 3
    %p293 = pnand %p291, %p292
    %p294 = pneg %p293
    // Predicated region
    $region45: #{patch_merging_forward.2} parent=5 // pred_check
      _
    $region46: #{patch_merging_forward.2} parent=5 // pred_check_branch
      %296 = sbr.rel (%p293) target = $region48
    $region47: #{patch_merging_forward.2} parent=5 // pred_region
      %s297 = ssub.s32 %s16, 1
      %p298 = scmp.lt.s32.totalorder %s21, 1
      %s299 = scalar_select %p298, %s21, 1
      %s300 = smul.addr %s299, 72
      %s301 = smul.addr %s300, 8
      %s302 = scalar_lea.vmem %s0, %s301
      %p303 = pneg %p42
      %p304 = pneg %p39
      %p305 = pneg %p63
      %p306 = pneg %p60
      %p307 = pneg %p84
      %p308 = pneg %p81
      %p309 = pneg %p105
      %p310 = pneg %p102
      %p311 = pneg %p126
      %p312 = pneg %p123
      %p313 = pneg %p147
      %p314 = pneg %p144
      %p315 = pneg %p168
      %p316 = pneg %p165
      %p317 = pneg %p194
      %p318 = pneg %p191
      %p319 = scmp.lt.s32.totalorder %s21, 1
      %s320 = scalar_select %p319, %s21, 1
      %s321 = smul.addr %s320, 8
      %s322 = smul.addr %s321, 4
      %s323 = scalar_lea.vmem %s7, %s322
      %p324 = pneg %p220
      %p325 = pneg %p217
      %p326 = scmp.lt.s32.totalorder %s21, 1
      %s327 = scalar_select %p326, %s21, 1
      %s328 = scalar_lea.vmem %s8, %s327
      %p329 = pneg %p246
      %p330 = pneg %p243
      %p331 = scmp.lt.s32.totalorder %s21, 1
      %s332 = scalar_select %p331, %s21, 1
      %s333 = scalar_lea.vmem %s9, %s332
      %p334 = scmp.lt.s32.totalorder %s21, 1
      %s335 = scalar_select %p334, %s21, 1
      %s336 = smul.addr %s335, 72
      %s337 = smul.addr %s336, 8
      %s338 = scalar_lea.vmem %s0, %s337
      %p339 = scmp.lt.s32.totalorder %s21, 1
      %s340 = scalar_select %p339, %s21, 1
      %s341 = smul.addr %s340, 8
      %s342 = smul.addr %s341, 4
      %s343 = scalar_lea.vmem %s7, %s342
      %p344 = scmp.lt.s32.totalorder %s21, 1
      %s345 = scalar_select %p344, %s21, 1
      %s346 = scalar_lea.vmem %s8, %s345
      %p347 = scmp.lt.s32.totalorder %s21, 1
      %s348 = scalar_select %p347, %s21, 1
      %s349 = scalar_lea.vmem %s9, %s348
      %v351 = vld [vmem:[%s2] sm:$0x1]
      %v352 = vld [vmem:[%s4] sm:$0x1]
      %v353 = vld [vmem:[%s6] sm:$0x1]
      %v354 = vld [vmem:[%s338] sm:$0xff]
      %v355 = vld [vmem:[%s338 + $0x8] sm:$0xff]
      %v356 = vld [vmem:[%s338 + $0x10] sm:$0xff]
      %v357 = vld [vmem:[%s338 + $0x18] sm:$0xff]
      %v358 = vld [vmem:[%s338 + $0x20] sm:$0xff]
      %v359 = vld [vmem:[%s338 + $0x28] sm:$0xff]
      %v360 = vld [vmem:[%s338 + $0x30] sm:$0xff]
      %v361 = vld [vmem:[%s338 + $0x38] sm:$0xff]
      %v362 = vld [vmem:[%s338 + $0x40] sm:$0xff]
      %v363 = vld [vmem:[%s338 + $0x48] sm:$0xff]
      %v364 = vld [vmem:[%s338 + $0x50] sm:$0xff]
      %v365 = vld [vmem:[%s338 + $0x58] sm:$0xff]
      %v366 = vld [vmem:[%s338 + $0x60] sm:$0xff]
      %v367 = vld [vmem:[%s338 + $0x68] sm:$0xff]
      %v368 = vld [vmem:[%s338 + $0x70] sm:$0xff]
      %v369 = vld [vmem:[%s338 + $0x78] sm:$0xff]
      %v370 = vld [vmem:[%s338 + $0x80] sm:$0xff]
      %v371 = vld [vmem:[%s338 + $0x88] sm:$0xff]
      %v372 = vld [vmem:[%s338 + $0x90] sm:$0xff]
      %v373 = vld [vmem:[%s338 + $0x98] sm:$0xff]
      %v374 = vld [vmem:[%s338 + $0xa0] sm:$0xff]
      %v375 = vld [vmem:[%s338 + $0xa8] sm:$0xff]
      %v376 = vld [vmem:[%s338 + $0xb0] sm:$0xff]
      %v377 = vld [vmem:[%s338 + $0xb8] sm:$0xff]
      %v378 = vld [vmem:[%s338 + $0xc0] sm:$0xff]
      %v379 = vld [vmem:[%s338 + $0xc8] sm:$0xff]
      %v380 = vld [vmem:[%s338 + $0xd0] sm:$0xff]
      %v381 = vld [vmem:[%s338 + $0xd8] sm:$0xff]
      %v382 = vld [vmem:[%s338 + $0xe0] sm:$0xff]
      %v383 = vld [vmem:[%s338 + $0xe8] sm:$0xff]
      %v384 = vld [vmem:[%s338 + $0xf0] sm:$0xff]
      %v385 = vld [vmem:[%s338 + $0xf8] sm:$0xff]
      %v386 = vld [vmem:[%s338 + $0x100] sm:$0xff]
      %v387 = vld [vmem:[%s338 + $0x108] sm:$0xff]
      %v388 = vld [vmem:[%s338 + $0x110] sm:$0xff]
      %v389 = vld [vmem:[%s338 + $0x118] sm:$0xff]
      %v390 = vld [vmem:[%s338 + $0x120] sm:$0xff]
      %v391 = vld [vmem:[%s338 + $0x128] sm:$0xff]
      %v392 = vld [vmem:[%s338 + $0x130] sm:$0xff]
      %v393 = vld [vmem:[%s338 + $0x138] sm:$0xff]
      %v394 = vld [vmem:[%s338 + $0x140] sm:$0xff]
      %v395 = vld [vmem:[%s338 + $0x148] sm:$0xff]
      %v396 = vld [vmem:[%s338 + $0x150] sm:$0xff]
      %v397 = vld [vmem:[%s338 + $0x158] sm:$0xff]
      %v398 = vld [vmem:[%s338 + $0x160] sm:$0xff]
      %v399 = vld [vmem:[%s338 + $0x168] sm:$0xff]
      %v400 = vld [vmem:[%s338 + $0x170] sm:$0xff]
      %v401 = vld [vmem:[%s338 + $0x178] sm:$0xff]
      %v402 = vld [vmem:[%s338 + $0x180] sm:$0xff]
      %v403 = vld [vmem:[%s338 + $0x188] sm:$0xff]
      %v404 = vld [vmem:[%s338 + $0x190] sm:$0xff]
      %v405 = vld [vmem:[%s338 + $0x198] sm:$0xff]
      %v406 = vld [vmem:[%s338 + $0x1a0] sm:$0xff]
      %v407 = vld [vmem:[%s338 + $0x1a8] sm:$0xff]
      %v408 = vld [vmem:[%s338 + $0x1b0] sm:$0xff]
      %v409 = vld [vmem:[%s338 + $0x1b8] sm:$0xff]
      %v410 = vld [vmem:[%s338 + $0x1c0] sm:$0xff]
      %v411 = vld [vmem:[%s338 + $0x1c8] sm:$0xff]
      %v412 = vld [vmem:[%s338 + $0x1d0] sm:$0xff]
      %v413 = vld [vmem:[%s338 + $0x1d8] sm:$0xff]
      %v414 = vld [vmem:[%s338 + $0x1e0] sm:$0xff]
      %v415 = vld [vmem:[%s338 + $0x1e8] sm:$0xff]
      %v416 = vld [vmem:[%s338 + $0x1f0] sm:$0xff]
      %v417 = vld [vmem:[%s338 + $0x1f8] sm:$0xff]
      %v418 = vld [vmem:[%s338 + $0x200] sm:$0xff]
      %v419 = vld [vmem:[%s338 + $0x208] sm:$0xff]
      %v420 = vld [vmem:[%s338 + $0x210] sm:$0xff]
      %v421 = vld [vmem:[%s338 + $0x218] sm:$0xff]
      %v422 = vld [vmem:[%s338 + $0x220] sm:$0xff]
      %v423 = vld [vmem:[%s338 + $0x228] sm:$0xff]
      %v424 = vld [vmem:[%s338 + $0x230] sm:$0xff]
      %v425 = vld [vmem:[%s338 + $0x238] sm:$0xff]
      %v426 = vpack.c.bf16 %v355, %v354
      %v427 = vpack.c.bf16 %v357, %v356
      %v428 = vpack.c.bf16 %v359, %v358
      %v429 = vpack.c.bf16 %v361, %v360
      %v430 = vpack.c.bf16 %v363, %v362
      %v431 = vpack.c.bf16 %v365, %v364
      %v432 = vpack.c.bf16 %v367, %v366
      %v433 = vpack.c.bf16 %v369, %v368
      %v434 = vpack.c.bf16 %v371, %v370
      %v435 = vpack.c.bf16 %v373, %v372
      %v436 = vpack.c.bf16 %v375, %v374
      %v437 = vpack.c.bf16 %v377, %v376
      %v438 = vpack.c.bf16 %v379, %v378
      %v439 = vpack.c.bf16 %v381, %v380
      %v440 = vpack.c.bf16 %v383, %v382
      %v441 = vpack.c.bf16 %v385, %v384
      %v442 = vpack.c.bf16 %v387, %v386
      %v443 = vpack.c.bf16 %v389, %v388
      %v444 = vpack.c.bf16 %v391, %v390
      %v445 = vpack.c.bf16 %v393, %v392
      %v446 = vpack.c.bf16 %v395, %v394
      %v447 = vpack.c.bf16 %v397, %v396
      %v448 = vpack.c.bf16 %v399, %v398
      %v449 = vpack.c.bf16 %v401, %v400
      %v450 = vpack.c.bf16 %v403, %v402
      %v451 = vpack.c.bf16 %v405, %v404
      %v452 = vpack.c.bf16 %v407, %v406
      %v453 = vpack.c.bf16 %v409, %v408
      %v454 = vpack.c.bf16 %v411, %v410
      %v455 = vpack.c.bf16 %v413, %v412
      %v456 = vpack.c.bf16 %v415, %v414
      %v457 = vpack.c.bf16 %v417, %v416
      %v458 = vpack.c.bf16 %v419, %v418
      %v459 = vpack.c.bf16 %v421, %v420
      %v460 = vpack.c.bf16 %v423, %v422
      %v461 = vpack.c.bf16 %v425, %v424
      %v462 = vld [vmem:[%s1] sm:$0x3]
      %vm463 = vcmask 31744
      %v465 = vsel %vm463, %v426, 0
      %v468 = vsel %vm463, %v427, 0
      %v471 = vsel %vm463, %v428, 0
      %v474 = vsel %vm463, %v429, 0
      %v477 = vsel %vm463, %v430, 0
      %v480 = vsel %vm463, %v431, 0
      %v483 = vsel %vm463, %v432, 0
      %v486 = vsel %vm463, %v433, 0
      %v489 = vsel %vm463, %v434, 0
      %v492 = vsel %vm463, %v435, 0
      %v495 = vsel %vm463, %v436, 0
      %v498 = vsel %vm463, %v437, 0
      %v501 = vsel %vm463, %v438, 0
      %v504 = vsel %vm463, %v439, 0
      %v507 = vsel %vm463, %v440, 0
      %v510 = vsel %vm463, %v441, 0
      %v513 = vsel %vm463, %v442, 0
      %v516 = vsel %vm463, %v443, 0
      %v519 = vsel %vm463, %v444, 0
      %v522 = vsel %vm463, %v445, 0
      %v525 = vsel %vm463, %v446, 0
      %v528 = vsel %vm463, %v447, 0
      %v531 = vsel %vm463, %v448, 0
      %v534 = vsel %vm463, %v449, 0
      %v537 = vsel %vm463, %v450, 0
      %v540 = vsel %vm463, %v451, 0
      %v543 = vsel %vm463, %v452, 0
      %v546 = vsel %vm463, %v453, 0
      %v549 = vsel %vm463, %v454, 0
      %v552 = vsel %vm463, %v455, 0
      %v555 = vsel %vm463, %v456, 0
      %v558 = vsel %vm463, %v457, 0
      %v561 = vsel %vm463, %v458, 0
      %v564 = vsel %vm463, %v459, 0
      %v567 = vsel %vm463, %v460, 0
      %v570 = vsel %vm463, %v461, 0
      %vm572 = vcmask 1041408
      %v574 = vsel %vm572, %v462, 0
      %576 = vmatprep.subr.bf16.mxu0 0
      %577 = vmatpush1.bf16.msra.mxu0 %v574
      %578 = vmatprep.subr.bf16.mxu0 0
      %579 = vmatpush1.bf16.msra.mxu0 0
      %580 = vmatprep.subr.bf16.mxu0 0
      %581 = vmatpush1.bf16.msra.mxu0 0
      %582 = vmatprep.subr.bf16.mxu0 0
      %583 = vmatpush1.bf16.msra.mxu0 0
      %584 = vmatprep.subr.bf16.mxu0 0
      %585 = vmatpush1.bf16.msra.mxu0 0
      %586 = vmatprep.subr.bf16.mxu0 0
      %587 = vmatpush1.bf16.msra.mxu0 0
      %588 = vmatprep.subr.bf16.mxu0 0
      %589 = vmatpush1.bf16.msra.mxu0 0
      %590 = vmatprep.subr.bf16.mxu0 0
      %591 = vmatpush1.bf16.msra.mxu0 0
      %592 = vmatprep.subr.bf16.mxu0 0
      %593 = vmatpush1.bf16.msra.mxu0 0
      %594 = vmatprep.subr.bf16.mxu0 0
      %595 = vmatpush1.bf16.msra.mxu0 0
      %596 = vmatprep.subr.bf16.mxu0 0
      %597 = vmatpush1.bf16.msra.mxu0 0
      %598 = vmatprep.subr.bf16.mxu0 0
      %599 = vmatpush1.bf16.msra.mxu0 0
      %600 = vmatprep.subr.bf16.mxu0 0
      %601 = vmatpush1.bf16.msra.mxu0 0
      %602 = vmatprep.subr.bf16.mxu0 0
      %603 = vmatpush1.bf16.msra.mxu0 0
      %604 = vmatprep.subr.bf16.mxu0 0
      %605 = vmatpush1.bf16.msra.mxu0 0
      %606 = vmatprep.subr.bf16.mxu0 0
      %607 = vmatpush1.bf16.msra.mxu0 0
      %608 = vmatprep.mubr.bf16.mxu0 0
      %609 = vmatmul.mubr.bf16.gmra.mrb[0].mxu0 %v465
      %v610 = vpop.f32.mrb[0].mxu0
      %v611 = vadd.f32 0.0, %v610
      %v612 = vpop.f32.mrb[0].mxu0
      %v613 = vpop.f32.mrb[0].mxu0
      %v614 = vadd.f32 0.0, %v613
      %v615 = vpop.f32.mrb[0].mxu0
      %616 = vmatprep.mubr.bf16.mxu0 0
      %617 = vmatmul.mubr.bf16.gmra.mrb[0].mxu0 %v468
      %v618 = vpop.f32.mrb[0].mxu0
      %v619 = vadd.f32 0.0, %v618
      %v620 = vpop.f32.mrb[0].mxu0
      %v621 = vpop.f32.mrb[0].mxu0
      %v622 = vadd.f32 0.0, %v621
      %v623 = vpop.f32.mrb[0].mxu0
      %624 = vmatprep.mubr.bf16.mxu0 0
      %625 = vmatmul.mubr.bf16.gmra.mrb[0].mxu0 %v471
      %v626 = vpop.f32.mrb[0].mxu0
      %v627 = vadd.f32 0.0, %v626
      %v628 = vpop.f32.mrb[0].mxu0
      %v629 = vpop.f32.mrb[0].mxu0
      %v630 = vadd.f32 0.0, %v629
      %v631 = vpop.f32.mrb[0].mxu0
      %632 = vmatprep.mubr.bf16.mxu0 0
      %633 = vmatmul.mubr.bf16.gmra.mrb[0].mxu0 %v474
      %v634 = vpop.f32.mrb[0].mxu0
      %v635 = vadd.f32 0.0, %v634
      %v636 = vpop.f32.mrb[0].mxu0
      %v637 = vpop.f32.mrb[0].mxu0
      %v638 = vadd.f32 0.0, %v637
      %v639 = vpop.f32.mrb[0].mxu0
      %640 = vmatprep.mubr.bf16.mxu0 0
      %641 = vmatmul.mubr.bf16.gmra.mrb[0].mxu0 %v477
      %v642 = vpop.f32.mrb[0].mxu0
      %v643 = vadd.f32 0.0, %v642
      %v644 = vpop.f32.mrb[0].mxu0
      %v645 = vpop.f32.mrb[0].mxu0
      %v646 = vadd.f32 0.0, %v645
      %v647 = vpop.f32.mrb[0].mxu0
      %648 = vmatprep.mubr.bf16.mxu0 0
      %649 = vmatmul.mubr.bf16.gmra.mrb[0].mxu0 %v480
      %v650 = vpop.f32.mrb[0].mxu0
      %v651 = vadd.f32 0.0, %v650
      %v652 = vpop.f32.mrb[0].mxu0
      %v653 = vpop.f32.mrb[0].mxu0
      %v654 = vadd.f32 0.0, %v653
      %v655 = vpop.f32.mrb[0].mxu0
      %656 = vmatprep.mubr.bf16.mxu0 0
      %657 = vmatmul.mubr.bf16.gmra.mrb[0].mxu0 %v483
      %v658 = vpop.f32.mrb[0].mxu0
      %v659 = vadd.f32 0.0, %v658
      %v660 = vpop.f32.mrb[0].mxu0
      %v661 = vpop.f32.mrb[0].mxu0
      %v662 = vadd.f32 0.0, %v661
      %v663 = vpop.f32.mrb[0].mxu0
      %664 = vmatprep.mubr.bf16.mxu0 0
      %665 = vmatmul.mubr.bf16.gmra.mrb[0].mxu0 %v486
      %v666 = vpop.f32.mrb[0].mxu0
      %v667 = vadd.f32 0.0, %v666
      %v668 = vpop.f32.mrb[0].mxu0
      %v669 = vpop.f32.mrb[0].mxu0
      %v670 = vadd.f32 0.0, %v669
      %v671 = vpop.f32.mrb[0].mxu0
      %672 = vmatprep.mubr.bf16.mxu0 0
      %673 = vmatmul.mubr.bf16.gmra.mrb[0].mxu0 %v489
      %v674 = vpop.f32.mrb[0].mxu0
      %v675 = vadd.f32 0.0, %v674
      %v676 = vpop.f32.mrb[0].mxu0
      %v677 = vpop.f32.mrb[0].mxu0
      %v678 = vadd.f32 0.0, %v677
      %v679 = vpop.f32.mrb[0].mxu0
      %680 = vmatprep.mubr.bf16.mxu0 0
      %681 = vmatmul.mubr.bf16.gmra.mrb[0].mxu0 %v492
      %v682 = vpop.f32.mrb[0].mxu0
      %v683 = vadd.f32 0.0, %v682
      %v684 = vpop.f32.mrb[0].mxu0
      %v685 = vpop.f32.mrb[0].mxu0
      %v686 = vpop.f32.mrb[0].mxu0
      %687 = vmatprep.mubr.bf16.mxu0 0
      %688 = vmatmul.mubr.bf16.gmra.mrb[0].mxu0 %v495
      %v689 = vpop.f32.mrb[0].mxu0
      %v690 = vadd.f32 0.0, %v689
      %v691 = vpop.f32.mrb[0].mxu0
      %v692 = vpop.f32.mrb[0].mxu0
      %v693 = vpop.f32.mrb[0].mxu0
      %694 = vmatprep.mubr.bf16.mxu0 0
      %695 = vmatmul.mubr.bf16.gmra.mrb[0].mxu0 %v498
      %v696 = vpop.f32.mrb[0].mxu0
      %v697 = vadd.f32 0.0, %v696
      %v698 = vpop.f32.mrb[0].mxu0
      %v699 = vpop.f32.mrb[0].mxu0
      %v700 = vpop.f32.mrb[0].mxu0
      %701 = vmatprep.mubr.bf16.mxu0 0
      %702 = vmatmul.mubr.bf16.gmra.mrb[0].mxu0 %v501
      %v703 = vpop.f32.mrb[0].mxu0
      %v704 = vadd.f32 0.0, %v703
      %v705 = vpop.f32.mrb[0].mxu0
      %v706 = vpop.f32.mrb[0].mxu0
      %v707 = vpop.f32.mrb[0].mxu0
      %708 = vmatprep.mubr.bf16.mxu0 0
      %709 = vmatmul.mubr.bf16.gmra.mrb[0].mxu0 %v504
      %v710 = vpop.f32.mrb[0].mxu0
      %v711 = vadd.f32 0.0, %v710
      %v712 = vpop.f32.mrb[0].mxu0
      %v713 = vpop.f32.mrb[0].mxu0
      %v714 = vpop.f32.mrb[0].mxu0
      %715 = vmatprep.mubr.bf16.mxu0 0
      %716 = vmatmul.mubr.bf16.gmra.mrb[0].mxu0 %v507
      %v717 = vpop.f32.mrb[0].mxu0
      %v718 = vadd.f32 0.0, %v717
      %v719 = vpop.f32.mrb[0].mxu0
      %v720 = vpop.f32.mrb[0].mxu0
      %v721 = vpop.f32.mrb[0].mxu0
      %722 = vmatprep.mubr.bf16.mxu0 0
      %723 = vmatmul.mubr.bf16.gmra.mrb[0].mxu0 %v510
      %v724 = vpop.f32.mrb[0].mxu0
      %v725 = vadd.f32 0.0, %v724
      %v726 = vpop.f32.mrb[0].mxu0
      %v727 = vpop.f32.mrb[0].mxu0
      %v728 = vpop.f32.mrb[0].mxu0
      %729 = vmatprep.mubr.bf16.mxu0 0
      %730 = vmatmul.mubr.bf16.gmra.mrb[0].mxu0 %v513
      %v731 = vpop.f32.mrb[0].mxu0
      %v732 = vadd.f32 0.0, %v731
      %v733 = vpop.f32.mrb[0].mxu0
      %v734 = vpop.f32.mrb[0].mxu0
      %v735 = vpop.f32.mrb[0].mxu0
      %736 = vmatprep.mubr.bf16.mxu0 0
      %737 = vmatmul.mubr.bf16.gmra.mrb[0].mxu0 %v516
      %v738 = vpop.f32.mrb[0].mxu0
      %v739 = vadd.f32 0.0, %v738
      %v740 = vpop.f32.mrb[0].mxu0
      %v741 = vpop.f32.mrb[0].mxu0
      %v742 = vpop.f32.mrb[0].mxu0
      %743 = vmatprep.mubr.bf16.mxu0 0
      %744 = vmatmul.mubr.bf16.gmra.mrb[0].mxu0 %v519
      %v745 = vpop.f32.mrb[0].mxu0
      %v746 = vadd.f32 0.0, %v745
      %v747 = vpop.f32.mrb[0].mxu0
      %v748 = vpop.f32.mrb[0].mxu0
      %v749 = vadd.f32 0.0, %v748
      %v750 = vpop.f32.mrb[0].mxu0
      %751 = vmatprep.mubr.bf16.mxu0 0
      %752 = vmatmul.mubr.bf16.gmra.mrb[0].mxu0 %v522
      %v753 = vpop.f32.mrb[0].mxu0
      %v754 = vadd.f32 0.0, %v753
      %v755 = vpop.f32.mrb[0].mxu0
      %v756 = vpop.f32.mrb[0].mxu0
      %v757 = vadd.f32 0.0, %v756
      %v758 = vpop.f32.mrb[0].mxu0
      %759 = vmatprep.mubr.bf16.mxu0 0
      %760 = vmatmul.mubr.bf16.gmra.mrb[0].mxu0 %v525
      %v761 = vpop.f32.mrb[0].mxu0
      %v762 = vadd.f32 0.0, %v761
      %v763 = vpop.f32.mrb[0].mxu0
      %v764 = vpop.f32.mrb[0].mxu0
      %v765 = vadd.f32 0.0, %v764
      %v766 = vpop.f32.mrb[0].mxu0
      %767 = vmatprep.mubr.bf16.mxu0 0
      %768 = vmatmul.mubr.bf16.gmra.mrb[0].mxu0 %v528
      %v769 = vpop.f32.mrb[0].mxu0
      %v770 = vadd.f32 0.0, %v769
      %v771 = vpop.f32.mrb[0].mxu0
      %v772 = vpop.f32.mrb[0].mxu0
      %v773 = vadd.f32 0.0, %v772
      %v774 = vpop.f32.mrb[0].mxu0
      %775 = vmatprep.mubr.bf16.mxu0 0
      %776 = vmatmul.mubr.bf16.gmra.mrb[0].mxu0 %v531
      %v777 = vpop.f32.mrb[0].mxu0
      %v778 = vadd.f32 0.0, %v777
      %v779 = vpop.f32.mrb[0].mxu0
      %v780 = vpop.f32.mrb[0].mxu0
      %v781 = vadd.f32 0.0, %v780
      %v782 = vpop.f32.mrb[0].mxu0
      %783 = vmatprep.mubr.bf16.mxu0 0
      %784 = vmatmul.mubr.bf16.gmra.mrb[0].mxu0 %v534
      %v785 = vpop.f32.mrb[0].mxu0
      %v786 = vadd.f32 0.0, %v785
      %v787 = vpop.f32.mrb[0].mxu0
      %v788 = vpop.f32.mrb[0].mxu0
      %v789 = vadd.f32 0.0, %v788
      %v790 = vpop.f32.mrb[0].mxu0
      %791 = vmatprep.mubr.bf16.mxu0 0
      %792 = vmatmul.mubr.bf16.gmra.mrb[0].mxu0 %v537
      %v793 = vpop.f32.mrb[0].mxu0
      %v794 = vadd.f32 0.0, %v793
      %v795 = vpop.f32.mrb[0].mxu0
      %v796 = vpop.f32.mrb[0].mxu0
      %v797 = vadd.f32 0.0, %v796
      %v798 = vpop.f32.mrb[0].mxu0
      %799 = vmatprep.mubr.bf16.mxu0 0
      %800 = vmatmul.mubr.bf16.gmra.mrb[0].mxu0 %v540
      %v801 = vpop.f32.mrb[0].mxu0
      %v802 = vadd.f32 0.0, %v801
      %v803 = vpop.f32.mrb[0].mxu0
      %v804 = vpop.f32.mrb[0].mxu0
      %v805 = vadd.f32 0.0, %v804
      %v806 = vpop.f32.mrb[0].mxu0
      %807 = vmatprep.mubr.bf16.mxu0 0
      %808 = vmatmul.mubr.bf16.gmra.mrb[0].mxu0 %v543
      %v809 = vpop.f32.mrb[0].mxu0
      %v810 = vpop.f32.mrb[0].mxu0
      %v811 = vpop.f32.mrb[0].mxu0
      %v812 = vpop.f32.mrb[0].mxu0
      %813 = vmatprep.mubr.bf16.mxu0 0
      %814 = vmatmul.mubr.bf16.gmra.mrb[0].mxu0 %v546
      %v815 = vpop.f32.mrb[0].mxu0
      %v816 = vadd.f32 0.0, %v815
      %v817 = vpop.f32.mrb[0].mxu0
      %v818 = vpop.f32.mrb[0].mxu0
      %v819 = vpop.f32.mrb[0].mxu0
      %820 = vmatprep.mubr.bf16.mxu0 0
      %821 = vmatmul.mubr.bf16.gmra.mrb[0].mxu0 %v549
      %v822 = vpop.f32.mrb[0].mxu0
      %v823 = vadd.f32 0.0, %v822
      %v824 = vpop.f32.mrb[0].mxu0
      %v825 = vpop.f32.mrb[0].mxu0
      %v826 = vpop.f32.mrb[0].mxu0
      %827 = vmatprep.mubr.bf16.mxu0 0
      %828 = vmatmul.mubr.bf16.gmra.mrb[0].mxu0 %v552
      %v829 = vpop.f32.mrb[0].mxu0
      %v830 = vadd.f32 0.0, %v829
      %v831 = vpop.f32.mrb[0].mxu0
      %v832 = vpop.f32.mrb[0].mxu0
      %v833 = vpop.f32.mrb[0].mxu0
      %834 = vmatprep.mubr.bf16.mxu0 0
      %835 = vmatmul.mubr.bf16.gmra.mrb[0].mxu0 %v555
      %v836 = vpop.f32.mrb[0].mxu0
      %v837 = vadd.f32 0.0, %v836
      %v838 = vpop.f32.mrb[0].mxu0
      %v839 = vpop.f32.mrb[0].mxu0
      %v840 = vpop.f32.mrb[0].mxu0
      %841 = vmatprep.mubr.bf16.mxu0 0
      %842 = vmatmul.mubr.bf16.gmra.mrb[0].mxu0 %v558
      %v843 = vpop.f32.mrb[0].mxu0
      %v844 = vadd.f32 0.0, %v843
      %v845 = vpop.f32.mrb[0].mxu0
      %v846 = vpop.f32.mrb[0].mxu0
      %v847 = vpop.f32.mrb[0].mxu0
      %848 = vmatprep.mubr.bf16.mxu0 0
      %849 = vmatmul.mubr.bf16.gmra.mrb[0].mxu0 %v561
      %v850 = vpop.f32.mrb[0].mxu0
      %v851 = vadd.f32 0.0, %v850
      %v852 = vpop.f32.mrb[0].mxu0
      %v853 = vpop.f32.mrb[0].mxu0
      %v854 = vpop.f32.mrb[0].mxu0
      %855 = vmatprep.mubr.bf16.mxu0 0
      %856 = vmatmul.mubr.bf16.gmra.mrb[0].mxu0 %v564
      %v857 = vpop.f32.mrb[0].mxu0
      %v858 = vadd.f32 0.0, %v857
      %v859 = vpop.f32.mrb[0].mxu0
      %v860 = vpop.f32.mrb[0].mxu0
      %v861 = vpop.f32.mrb[0].mxu0
      %862 = vmatprep.mubr.bf16.mxu0 0
      %863 = vmatmul.mubr.bf16.gmra.mrb[0].mxu0 %v567
      %v864 = vpop.f32.mrb[0].mxu0
      %v865 = vadd.f32 0.0, %v864
      %v866 = vpop.f32.mrb[0].mxu0
      %v867 = vpop.f32.mrb[0].mxu0
      %v868 = vpop.f32.mrb[0].mxu0
      %869 = vmatprep.mubr.bf16.mxu0 0
      %870 = vmatmul.mubr.bf16.gmra.mrb[0].mxu0 %v570
      %v871 = vpop.f32.mrb[0].mxu0
      %v872 = vpop.f32.mrb[0].mxu0
      %v873 = vpop.f32.mrb[0].mxu0
      %v874 = vpop.f32.mrb[0].mxu0
      %875 = vdwg.mxu0
      %v876 = vlaneseq
      %v877 = vshrl.u32 %v876, 7
      %v878 = vadd.s32 %v877, 8
      %vm879 = vcmp.ge.s32.totalorder %v877, 1
      %vm880 = vcmp.ge.s32.totalorder %v878, 1
      %vm881 = vmand 0, %vm879
      %vm882 = vmand 0, %vm880
      %vm883 = vmand 1, %vm879
      %vm884 = vmand 1, %vm880
      %vm885 = vcmp.le.s32.totalorder %v877, 8
      %vm886 = vcmp.le.s32.totalorder %v878, 8
      %vm887 = vmand %vm881, %vm885
      %vm888 = vmand %vm882, %vm886
      %vm889 = vmand %vm883, %vm885
      %vm890 = vmand %vm884, %vm886
      %v892 = vlaneseq
      %v893 = vshrl.u32 %v892, 7
      %v894 = vsub.s32 0, %v893
      %v895 = vrot.slane %v351, %v894
      %v897 = vadd.f32 %v611, %v895
      %v898 = vadd.f32 %v614, %v895
      %v899 = vadd.f32 %v619, %v895
      %v900 = vadd.f32 %v622, %v895
      %v901 = vadd.f32 %v627, %v895
      %v902 = vadd.f32 %v630, %v895
      %v903 = vadd.f32 %v635, %v895
      %v904 = vadd.f32 %v638, %v895
      %v905 = vadd.f32 %v643, %v895
      %v906 = vadd.f32 %v646, %v895
      %v907 = vadd.f32 %v651, %v895
      %v908 = vadd.f32 %v654, %v895
      %v909 = vadd.f32 %v659, %v895
      %v910 = vadd.f32 %v662, %v895
      %v911 = vadd.f32 %v667, %v895
      %v912 = vadd.f32 %v670, %v895
      %v913 = vadd.f32 %v675, %v895
      %v914 = vadd.f32 %v678, %v895
      %v915 = vmax.f32 %v897, 0.0
      %v916 = vmax.f32 %v898, 0.0
      %v917 = vmax.f32 %v899, 0.0
      %v918 = vmax.f32 %v900, 0.0
      %v919 = vmax.f32 %v901, 0.0
      %v920 = vmax.f32 %v902, 0.0
      %v921 = vmax.f32 %v903, 0.0
      %v922 = vmax.f32 %v904, 0.0
      %v923 = vmax.f32 %v905, 0.0
      %v924 = vmax.f32 %v906, 0.0
      %v925 = vmax.f32 %v907, 0.0
      %v926 = vmax.f32 %v908, 0.0
      %v927 = vmax.f32 %v909, 0.0
      %v928 = vmax.f32 %v910, 0.0
      %v929 = vmax.f32 %v911, 0.0
      %v930 = vmax.f32 %v912, 0.0
      %v931 = vmax.f32 %v913, 0.0
      %v932 = vmax.f32 %v914, 0.0
      %v933 = vsel %vm887, 1, 0
      %v934 = vsel %vm888, 1, 0
      %v935 = vsel %vm889, 1, 0
      %v936 = vsel %vm890, 1, 0
      %vm937 = vcmp.eq.s32.totalorder %v933, 1
      %vm938 = vcmp.eq.s32.totalorder %v934, 1
      %vm939 = vcmp.eq.s32.totalorder %v935, 1
      %vm940 = vcmp.eq.s32.totalorder %v936, 1
      %v941 = vsel %vm937, %v915, 0.0
      %v942 = vsel %vm938, %v916, 0.0
      %v943 = vsel %vm939, %v917, 0.0
      %v944 = vsel %vm940, %v918, 0.0
      %v945 = vsel %vm939, %v919, 0.0
      %v946 = vsel %vm940, %v920, 0.0
      %v947 = vsel %vm939, %v921, 0.0
      %v948 = vsel %vm940, %v922, 0.0
      %v949 = vsel %vm939, %v923, 0.0
      %v950 = vsel %vm940, %v924, 0.0
      %v951 = vsel %vm939, %v925, 0.0
      %v952 = vsel %vm940, %v926, 0.0
      %v953 = vsel %vm939, %v927, 0.0
      %v954 = vsel %vm940, %v928, 0.0
      %v955 = vsel %vm939, %v929, 0.0
      %v956 = vsel %vm940, %v930, 0.0
      %v957 = vsel %vm939, %v931, 0.0
      %v958 = vsel %vm940, %v932, 0.0
      %v959 = vld [vmem:[%s3] sm:$0x1]
      %v960 = vlaneseq
      %v961 = vshrl.u32 %v960, 7
      %v962 = vsub.s32 0, %v961
      %v963 = vrot.slane %v959, %v962
      %v964 = vmul.f32 %v941, %v963
      %v965 = vmul.f32 %v943, %v963
      %v966 = vmul.f32 %v945, %v963
      %v967 = vmul.f32 %v947, %v963
      %v968 = vmul.f32 %v949, %v963
      %v969 = vmul.f32 %v951, %v963
      %v970 = vmul.f32 %v953, %v963
      %v971 = vmul.f32 %v955, %v963
      %v972 = vld [vmem:[%s3 + $0x2] sm:$0x1]
      %v973 = vlaneseq
      %v974 = vshrl.u32 %v973, 7
      %v975 = vsub.s32 0, %v974
      %v976 = vrot.slane %v972, %v975
      %v977 = vmul.f32 %v941, %v976
      %v978 = vmul.f32 %v942, %v976
      %v979 = vmul.f32 %v943, %v976
      %v980 = vmul.f32 %v944, %v976
      %v981 = vmul.f32 %v945, %v976
      %v982 = vmul.f32 %v946, %v976
      %v983 = vmul.f32 %v947, %v976
      %v984 = vmul.f32 %v948, %v976
      %v985 = vmul.f32 %v949, %v976
      %v986 = vmul.f32 %v950, %v976
      %v987 = vmul.f32 %v951, %v976
      %v988 = vmul.f32 %v952, %v976
      %v989 = vmul.f32 %v953, %v976
      %v990 = vmul.f32 %v954, %v976
      %v991 = vmul.f32 %v955, %v976
      %v992 = vmul.f32 %v956, %v976
      %vm1009 = vcmask 1046528
      %v1010 = vrot.slane %v977, 1
      %v1011 = vrot.slane %v978, 1
      %v1012 = vsel %vm1009, %v1010, %v1011
      %v1013 = vrot.slane %v979, 1
      %v1014 = vrot.slane %v980, 1
      %v1015 = vsel %vm1009, %v1013, %v1014
      %v1016 = vrot.slane %v981, 1
      %v1017 = vrot.slane %v982, 1
      %v1018 = vsel %vm1009, %v1016, %v1017
      %v1019 = vrot.slane %v983, 1
      %v1020 = vrot.slane %v984, 1
      %v1021 = vsel %vm1009, %v1019, %v1020
      %v1022 = vrot.slane %v985, 1
      %v1023 = vrot.slane %v986, 1
      %v1024 = vsel %vm1009, %v1022, %v1023
      %v1025 = vrot.slane %v987, 1
      %v1026 = vrot.slane %v988, 1
      %v1027 = vsel %vm1009, %v1025, %v1026
      %v1028 = vrot.slane %v989, 1
      %v1029 = vrot.slane %v990, 1
      %v1030 = vsel %vm1009, %v1028, %v1029
      %v1031 = vrot.slane %v991, 1
      %v1032 = vrot.slane %v992, 1
      %v1033 = vsel %vm1009, %v1031, %v1032
      %v1042 = vadd.f32 %v964, %v1012
      %v1043 = vadd.f32 %v965, %v1015
      %v1044 = vadd.f32 %v966, %v1018
      %v1045 = vadd.f32 %v967, %v1021
      %v1046 = vadd.f32 %v968, %v1024
      %v1047 = vadd.f32 %v969, %v1027
      %v1048 = vadd.f32 %v970, %v1030
      %v1049 = vadd.f32 %v971, %v1033
      %s1050 = scalar_lea.vmem %s3, 8
      %v1051 = vld [vmem:[%s1050] sm:$0x1]
      %v1052 = vlaneseq
      %v1053 = vshrl.u32 %v1052, 7
      %v1054 = vsub.s32 0, %v1053
      %v1055 = vrot.slane %v1051, %v1054
      %v1056 = vmul.f32 %v943, %v1055
      %v1057 = vmul.f32 %v945, %v1055
      %v1058 = vmul.f32 %v947, %v1055
      %v1059 = vmul.f32 %v949, %v1055
      %v1060 = vmul.f32 %v951, %v1055
      %v1061 = vmul.f32 %v953, %v1055
      %v1062 = vmul.f32 %v955, %v1055
      %v1063 = vmul.f32 %v957, %v1055
      %v1064 = vadd.f32 %v1042, %v1056
      %v1065 = vadd.f32 %v1043, %v1057
      %v1066 = vadd.f32 %v1044, %v1058
      %v1067 = vadd.f32 %v1045, %v1059
      %v1068 = vadd.f32 %v1046, %v1060
      %v1069 = vadd.f32 %v1047, %v1061
      %v1070 = vadd.f32 %v1048, %v1062
      %v1071 = vadd.f32 %v1049, %v1063
      %v1072 = vld [vmem:[%s1050 + $0x2] sm:$0x1]
      %v1073 = vlaneseq
      %v1074 = vshrl.u32 %v1073, 7
      %v1075 = vsub.s32 0, %v1074
      %v1076 = vrot.slane %v1072, %v1075
      %v1077 = vmul.f32 %v943, %v1076
      %v1078 = vmul.f32 %v944, %v1076
      %v1079 = vmul.f32 %v945, %v1076
      %v1080 = vmul.f32 %v946, %v1076
      %v1081 = vmul.f32 %v947, %v1076
      %v1082 = vmul.f32 %v948, %v1076
      %v1083 = vmul.f32 %v949, %v1076
      %v1084 = vmul.f32 %v950, %v1076
      %v1085 = vmul.f32 %v951, %v1076
      %v1086 = vmul.f32 %v952, %v1076
      %v1087 = vmul.f32 %v953, %v1076
      %v1088 = vmul.f32 %v954, %v1076
      %v1089 = vmul.f32 %v955, %v1076
      %v1090 = vmul.f32 %v956, %v1076
      %v1091 = vmul.f32 %v957, %v1076
      %v1092 = vmul.f32 %v958, %v1076
      %v1109 = vrot.slane %v1077, 1
      %v1110 = vrot.slane %v1078, 1
      %v1111 = vsel %vm1009, %v1109, %v1110
      %v1112 = vrot.slane %v1079, 1
      %v1113 = vrot.slane %v1080, 1
      %v1114 = vsel %vm1009, %v1112, %v1113
      %v1115 = vrot.slane %v1081, 1
      %v1116 = vrot.slane %v1082, 1
      %v1117 = vsel %vm1009, %v1115, %v1116
      %v1118 = vrot.slane %v1083, 1
      %v1119 = vrot.slane %v1084, 1
      %v1120 = vsel %vm1009, %v1118, %v1119
      %v1121 = vrot.slane %v1085, 1
      %v1122 = vrot.slane %v1086, 1
      %v1123 = vsel %vm1009, %v1121, %v1122
      %v1124 = vrot.slane %v1087, 1
      %v1125 = vrot.slane %v1088, 1
      %v1126 = vsel %vm1009, %v1124, %v1125
      %v1127 = vrot.slane %v1089, 1
      %v1128 = vrot.slane %v1090, 1
      %v1129 = vsel %vm1009, %v1127, %v1128
      %v1130 = vrot.slane %v1091, 1
      %v1131 = vrot.slane %v1092, 1
      %v1132 = vsel %vm1009, %v1130, %v1131
      %v1141 = vadd.f32 %v1064, %v1111
      %v1142 = vadd.f32 %v1065, %v1114
      %v1143 = vadd.f32 %v1066, %v1117
      %v1144 = vadd.f32 %v1067, %v1120
      %v1145 = vadd.f32 %v1068, %v1123
      %v1146 = vadd.f32 %v1069, %v1126
      %v1147 = vadd.f32 %v1070, %v1129
      %v1148 = vadd.f32 %v1071, %v1132
      %v1149 = vadd.f32 %v1141, 0.0
      %v1150 = vadd.f32 %v1142, 0.0
      %v1151 = vadd.f32 %v1143, 0.0
      %v1152 = vadd.f32 %v1144, 0.0
      %v1153 = vadd.f32 %v1145, 0.0
      %v1154 = vadd.f32 %v1146, 0.0
      %v1155 = vadd.f32 %v1147, 0.0
      %v1156 = vadd.f32 %v1148, 0.0
      %vm1157 = vcmp.ge.s32.totalorder %v877, 0
      %vm1158 = vmand 0, %vm1157
      %vm1159 = vmand 1, %vm1157
      %vm1160 = vcmp.le.s32.totalorder %v877, 7
      %vm1161 = vmand %vm1158, %vm1160
      %vm1162 = vmand %vm1159, %vm1160
      %v1163 = vadd.f32 %v683, %v895
      %v1164 = vadd.f32 %v690, %v895
      %v1165 = vadd.f32 %v697, %v895
      %v1166 = vadd.f32 %v704, %v895
      %v1167 = vadd.f32 %v711, %v895
      %v1168 = vadd.f32 %v718, %v895
      %v1169 = vadd.f32 %v725, %v895
      %v1170 = vadd.f32 %v732, %v895
      %v1171 = vadd.f32 %v739, %v895
      %v1172 = vmax.f32 %v1163, 0.0
      %v1173 = vmax.f32 %v1164, 0.0
      %v1174 = vmax.f32 %v1165, 0.0
      %v1175 = vmax.f32 %v1166, 0.0
      %v1176 = vmax.f32 %v1167, 0.0
      %v1177 = vmax.f32 %v1168, 0.0
      %v1178 = vmax.f32 %v1169, 0.0
      %v1179 = vmax.f32 %v1170, 0.0
      %v1180 = vmax.f32 %v1171, 0.0
      %v1181 = vsel %vm1161, 1, 0
      %v1182 = vsel %vm1162, 1, 0
      %vm1183 = vcmp.eq.s32.totalorder %v1181, 1
      %vm1184 = vcmp.eq.s32.totalorder %v1182, 1
      %v1185 = vsel %vm1183, %v1172, 0.0
      %v1186 = vsel %vm1184, %v1173, 0.0
      %v1187 = vsel %vm1184, %v1174, 0.0
      %v1188 = vsel %vm1184, %v1175, 0.0
      %v1189 = vsel %vm1184, %v1176, 0.0
      %v1190 = vsel %vm1184, %v1177, 0.0
      %v1191 = vsel %vm1184, %v1178, 0.0
      %v1192 = vsel %vm1184, %v1179, 0.0
      %v1193 = vsel %vm1184, %v1180, 0.0
      %v1194 = vld [vmem:[%s3 + $0x1] sm:$0x1]
      %v1195 = vlaneseq
      %v1196 = vshrl.u32 %v1195, 7
      %v1197 = vsub.s32 0, %v1196
      %v1198 = vrot.slane %v1194, %v1197
      %v1199 = vmul.f32 %v1185, %v1198
      %v1200 = vmul.f32 %v1186, %v1198
      %v1201 = vmul.f32 %v1187, %v1198
      %v1202 = vmul.f32 %v1188, %v1198
      %v1203 = vmul.f32 %v1189, %v1198
      %v1204 = vmul.f32 %v1190, %v1198
      %v1205 = vmul.f32 %v1191, %v1198
      %v1206 = vmul.f32 %v1192, %v1198
      %v1207 = vld [vmem:[%s1050 + $0x1] sm:$0x1]
      %v1208 = vlaneseq
      %v1209 = vshrl.u32 %v1208, 7
      %v1210 = vsub.s32 0, %v1209
      %v1211 = vrot.slane %v1207, %v1210
      %v1212 = vmul.f32 %v1186, %v1211
      %v1213 = vmul.f32 %v1187, %v1211
      %v1214 = vmul.f32 %v1188, %v1211
      %v1215 = vmul.f32 %v1189, %v1211
      %v1216 = vmul.f32 %v1190, %v1211
      %v1217 = vmul.f32 %v1191, %v1211
      %v1218 = vmul.f32 %v1192, %v1211
      %v1219 = vmul.f32 %v1193, %v1211
      %v1220 = vadd.f32 %v1199, %v1212
      %v1221 = vadd.f32 %v1200, %v1213
      %v1222 = vadd.f32 %v1201, %v1214
      %v1223 = vadd.f32 %v1202, %v1215
      %v1224 = vadd.f32 %v1203, %v1216
      %v1225 = vadd.f32 %v1204, %v1217
      %v1226 = vadd.f32 %v1205, %v1218
      %v1227 = vadd.f32 %v1206, %v1219
      %v1228 = vadd.f32 %v1149, %v1220
      %v1229 = vadd.f32 %v1150, %v1221
      %v1230 = vadd.f32 %v1151, %v1222
      %v1231 = vadd.f32 %v1152, %v1223
      %v1232 = vadd.f32 %v1153, %v1224
      %v1233 = vadd.f32 %v1154, %v1225
      %v1234 = vadd.f32 %v1155, %v1226
      %v1235 = vadd.f32 %v1156, %v1227
      %v1236 = vadd.f32 %v746, %v895
      %v1237 = vadd.f32 %v749, %v895
      %v1238 = vadd.f32 %v754, %v895
      %v1239 = vadd.f32 %v757, %v895
      %v1240 = vadd.f32 %v762, %v895
      %v1241 = vadd.f32 %v765, %v895
      %v1242 = vadd.f32 %v770, %v895
      %v1243 = vadd.f32 %v773, %v895
      %v1244 = vadd.f32 %v778, %v895
      %v1245 = vadd.f32 %v781, %v895
      %v1246 = vadd.f32 %v786, %v895
      %v1247 = vadd.f32 %v789, %v895
      %v1248 = vadd.f32 %v794, %v895
      %v1249 = vadd.f32 %v797, %v895
      %v1250 = vadd.f32 %v802, %v895
      %v1251 = vadd.f32 %v805, %v895
      %v1252 = vmax.f32 %v1236, 0.0
      %v1253 = vmax.f32 %v1237, 0.0
      %v1254 = vmax.f32 %v1238, 0.0
      %v1255 = vmax.f32 %v1239, 0.0
      %v1256 = vmax.f32 %v1240, 0.0
      %v1257 = vmax.f32 %v1241, 0.0
      %v1258 = vmax.f32 %v1242, 0.0
      %v1259 = vmax.f32 %v1243, 0.0
      %v1260 = vmax.f32 %v1244, 0.0
      %v1261 = vmax.f32 %v1245, 0.0
      %v1262 = vmax.f32 %v1246, 0.0
      %v1263 = vmax.f32 %v1247, 0.0
      %v1264 = vmax.f32 %v1248, 0.0
      %v1265 = vmax.f32 %v1249, 0.0
      %v1266 = vmax.f32 %v1250, 0.0
      %v1267 = vmax.f32 %v1251, 0.0
      %v1268 = vsel %vm939, %v1252, 0.0
      %v1269 = vsel %vm940, %v1253, 0.0
      %v1270 = vsel %vm939, %v1254, 0.0
      %v1271 = vsel %vm940, %v1255, 0.0
      %v1272 = vsel %vm939, %v1256, 0.0
      %v1273 = vsel %vm940, %v1257, 0.0
      %v1274 = vsel %vm939, %v1258, 0.0
      %v1275 = vsel %vm940, %v1259, 0.0
      %v1276 = vsel %vm939, %v1260, 0.0
      %v1277 = vsel %vm940, %v1261, 0.0
      %v1278 = vsel %vm939, %v1262, 0.0
      %v1279 = vsel %vm940, %v1263, 0.0
      %v1280 = vsel %vm939, %v1264, 0.0
      %v1281 = vsel %vm940, %v1265, 0.0
      %v1282 = vsel %vm939, %v1266, 0.0
      %v1283 = vsel %vm940, %v1267, 0.0
      %s1284 = scalar_lea.vmem %s3, 4
      %v1285 = vld [vmem:[%s1284] sm:$0x1]
      %v1286 = vlaneseq
      %v1287 = vshrl.u32 %v1286, 7
      %v1288 = vsub.s32 0, %v1287
      %v1289 = vrot.slane %v1285, %v1288
      %v1290 = vmul.f32 %v1268, %v1289
      %v1291 = vmul.f32 %v1270, %v1289
      %v1292 = vmul.f32 %v1272, %v1289
      %v1293 = vmul.f32 %v1274, %v1289
      %v1294 = vmul.f32 %v1276, %v1289
      %v1295 = vmul.f32 %v1278, %v1289
      %v1296 = vmul.f32 %v1280, %v1289
      %v1297 = vmul.f32 %v1282, %v1289
      %v1298 = vld [vmem:[%s1284 + $0x2] sm:$0x1]
      %v1299 = vlaneseq
      %v1300 = vshrl.u32 %v1299, 7
      %v1301 = vsub.s32 0, %v1300
      %v1302 = vrot.slane %v1298, %v1301
      %v1303 = vmul.f32 %v1268, %v1302
      %v1304 = vmul.f32 %v1269, %v1302
      %v1305 = vmul.f32 %v1270, %v1302
      %v1306 = vmul.f32 %v1271, %v1302
      %v1307 = vmul.f32 %v1272, %v1302
      %v1308 = vmul.f32 %v1273, %v1302
      %v1309 = vmul.f32 %v1274, %v1302
      %v1310 = vmul.f32 %v1275, %v1302
      %v1311 = vmul.f32 %v1276, %v1302
      %v1312 = vmul.f32 %v1277, %v1302
      %v1313 = vmul.f32 %v1278, %v1302
      %v1314 = vmul.f32 %v1279, %v1302
      %v1315 = vmul.f32 %v1280, %v1302
      %v1316 = vmul.f32 %v1281, %v1302
      %v1317 = vmul.f32 %v1282, %v1302
      %v1318 = vmul.f32 %v1283, %v1302
      %v1335 = vrot.slane %v1303, 1
      %v1336 = vrot.slane %v1304, 1
      %v1337 = vsel %vm1009, %v1335, %v1336
      %v1338 = vrot.slane %v1305, 1
      %v1339 = vrot.slane %v1306, 1
      %v1340 = vsel %vm1009, %v1338, %v1339
      %v1341 = vrot.slane %v1307, 1
      %v1342 = vrot.slane %v1308, 1
      %v1343 = vsel %vm1009, %v1341, %v1342
      %v1344 = vrot.slane %v1309, 1
      %v1345 = vrot.slane %v1310, 1
      %v1346 = vsel %vm1009, %v1344, %v1345
      %v1347 = vrot.slane %v1311, 1
      %v1348 = vrot.slane %v1312, 1
      %v1349 = vsel %vm1009, %v1347, %v1348
      %v1350 = vrot.slane %v1313, 1
      %v1351 = vrot.slane %v1314, 1
      %v1352 = vsel %vm1009, %v1350, %v1351
      %v1353 = vrot.slane %v1315, 1
      %v1354 = vrot.slane %v1316, 1
      %v1355 = vsel %vm1009, %v1353, %v1354
      %v1356 = vrot.slane %v1317, 1
      %v1357 = vrot.slane %v1318, 1
      %v1358 = vsel %vm1009, %v1356, %v1357
      %v1367 = vadd.f32 %v1290, %v1337
      %v1368 = vadd.f32 %v1291, %v1340
      %v1369 = vadd.f32 %v1292, %v1343
      %v1370 = vadd.f32 %v1293, %v1346
      %v1371 = vadd.f32 %v1294, %v1349
      %v1372 = vadd.f32 %v1295, %v1352
      %v1373 = vadd.f32 %v1296, %v1355
      %v1374 = vadd.f32 %v1297, %v1358
      %v1375 = vadd.f32 %v1228, %v1367
      %v1376 = vadd.f32 %v1229, %v1368
      %v1377 = vadd.f32 %v1230, %v1369
      %v1378 = vadd.f32 %v1231, %v1370
      %v1379 = vadd.f32 %v1232, %v1371
      %v1380 = vadd.f32 %v1233, %v1372
      %v1381 = vadd.f32 %v1234, %v1373
      %v1382 = vadd.f32 %v1235, %v1374
      %v1383 = vadd.f32 %v816, %v895
      %v1384 = vadd.f32 %v823, %v895
      %v1385 = vadd.f32 %v830, %v895
      %v1386 = vadd.f32 %v837, %v895
      %v1387 = vadd.f32 %v844, %v895
      %v1388 = vadd.f32 %v851, %v895
      %v1389 = vadd.f32 %v858, %v895
      %v1390 = vadd.f32 %v865, %v895
      %v1391 = vmax.f32 %v1383, 0.0
      %v1392 = vmax.f32 %v1384, 0.0
      %v1393 = vmax.f32 %v1385, 0.0
      %v1394 = vmax.f32 %v1386, 0.0
      %v1395 = vmax.f32 %v1387, 0.0
      %v1396 = vmax.f32 %v1388, 0.0
      %v1397 = vmax.f32 %v1389, 0.0
      %v1398 = vmax.f32 %v1390, 0.0
      %v1399 = vsel %vm1184, %v1391, 0.0
      %v1400 = vsel %vm1184, %v1392, 0.0
      %v1401 = vsel %vm1184, %v1393, 0.0
      %v1402 = vsel %vm1184, %v1394, 0.0
      %v1403 = vsel %vm1184, %v1395, 0.0
      %v1404 = vsel %vm1184, %v1396, 0.0
      %v1405 = vsel %vm1184, %v1397, 0.0
      %v1406 = vsel %vm1184, %v1398, 0.0
      %v1407 = vld [vmem:[%s1284 + $0x1] sm:$0x1]
      %v1408 = vlaneseq
      %v1409 = vshrl.u32 %v1408, 7
      %v1410 = vsub.s32 0, %v1409
      %v1411 = vrot.slane %v1407, %v1410
      %v1412 = vmul.f32 %v1399, %v1411
      %v1413 = vmul.f32 %v1400, %v1411
      %v1414 = vmul.f32 %v1401, %v1411
      %v1415 = vmul.f32 %v1402, %v1411
      %v1416 = vmul.f32 %v1403, %v1411
      %v1417 = vmul.f32 %v1404, %v1411
      %v1418 = vmul.f32 %v1405, %v1411
      %v1419 = vmul.f32 %v1406, %v1411
      %v1420 = vadd.f32 %v1375, %v1412
      %v1421 = vadd.f32 %v1376, %v1413
      %v1422 = vadd.f32 %v1377, %v1414
      %v1423 = vadd.f32 %v1378, %v1415
      %v1424 = vadd.f32 %v1379, %v1416
      %v1425 = vadd.f32 %v1380, %v1417
      %v1426 = vadd.f32 %v1381, %v1418
      %v1427 = vadd.f32 %v1382, %v1419
      %v1429 = vlaneseq
      %v1430 = vshrl.u32 %v1429, 7
      %v1431 = vsub.s32 0, %v1430
      %v1432 = vrot.slane %v352, %v1431
      %v1434 = vadd.f32 %v1420, %v1432
      %v1435 = vadd.f32 %v1421, %v1432
      %v1436 = vadd.f32 %v1422, %v1432
      %v1437 = vadd.f32 %v1423, %v1432
      %v1438 = vadd.f32 %v1424, %v1432
      %v1439 = vadd.f32 %v1425, %v1432
      %v1440 = vadd.f32 %v1426, %v1432
      %v1441 = vadd.f32 %v1427, %v1432
      %v1442 = vmax.f32 %v1434, 0.0
      %v1443 = vmax.f32 %v1435, 0.0
      %v1444 = vmax.f32 %v1436, 0.0
      %v1445 = vmax.f32 %v1437, 0.0
      %v1446 = vmax.f32 %v1438, 0.0
      %v1447 = vmax.f32 %v1439, 0.0
      %v1448 = vmax.f32 %v1440, 0.0
      %v1449 = vmax.f32 %v1441, 0.0
      %v1450 = vpack.c.bf16 %v1443, %v1442
      %v1451 = vpack.c.bf16 %v1445, %v1444
      %v1452 = vpack.c.bf16 %v1447, %v1446
      %v1453 = vpack.c.bf16 %v1449, %v1448
      %v1454 = vld [vmem:[%s5] sm:$0xf]
      %v1455 = vld [vmem:[%s5 + $0x4] sm:$0xf]
      %v1456 = vld [vmem:[%s5 + $0x8] sm:$0xf]
      %v1457 = vld [vmem:[%s5 + $0xc] sm:$0xf]
      %v1459 = vlaneseq
      %v1460 = vshrl.u32 %v1459, 7
      %v1461 = vsub.s32 0, %v1460
      %v1462 = vrot.slane %v353, %v1461
      %v1468 = vunpack.c.l.b16 %v1454
      %v1469 = vunpack.c.l.b16 %v1455
      %v1470 = vunpack.c.l.b16 %v1456
      %v1471 = vunpack.c.l.b16 %v1457
      %v1472 = vpack.c.b16 %v1469, %v1468
      %v1473 = vpack.c.b16 %v1471, %v1470
      %vm1476 = vcmask 261120
      %v1478 = vsel %vm1476, %v1450, 0
      %v1481 = vsel %vm1476, %v1451, 0
      %v1484 = vsel %vm1476, %v1452, 0
      %v1487 = vsel %vm1476, %v1453, 0
      %1489 = vmatprep.subr.bf16.mxu0 0
      %1490 = vmatpush1.bf16.msra.mxu0 %v1472
      %1491 = vmatprep.subr.bf16.mxu0 0
      %1492 = vmatpush1.bf16.msra.mxu0 %v1473
      %1493 = vmatprep.subr.bf16.mxu0 0
      %1494 = vmatpush1.bf16.msra.mxu0 0
      %1495 = vmatprep.subr.bf16.mxu0 0
      %1496 = vmatpush1.bf16.msra.mxu0 0
      %1497 = vmatprep.subr.bf16.mxu0 0
      %1498 = vmatpush1.bf16.msra.mxu0 0
      %1499 = vmatprep.subr.bf16.mxu0 0
      %1500 = vmatpush1.bf16.msra.mxu0 0
      %1501 = vmatprep.subr.bf16.mxu0 0
      %1502 = vmatpush1.bf16.msra.mxu0 0
      %1503 = vmatprep.subr.bf16.mxu0 0
      %1504 = vmatpush1.bf16.msra.mxu0 0
      %1505 = vmatprep.subr.bf16.mxu0 0
      %1506 = vmatpush1.bf16.msra.mxu0 0
      %1507 = vmatprep.subr.bf16.mxu0 0
      %1508 = vmatpush1.bf16.msra.mxu0 0
      %1509 = vmatprep.subr.bf16.mxu0 0
      %1510 = vmatpush1.bf16.msra.mxu0 0
      %1511 = vmatprep.subr.bf16.mxu0 0
      %1512 = vmatpush1.bf16.msra.mxu0 0
      %1513 = vmatprep.subr.bf16.mxu0 0
      %1514 = vmatpush1.bf16.msra.mxu0 0
      %1515 = vmatprep.subr.bf16.mxu0 0
      %1516 = vmatpush1.bf16.msra.mxu0 0
      %1517 = vmatprep.subr.bf16.mxu0 0
      %1518 = vmatpush1.bf16.msra.mxu0 0
      %1519 = vmatprep.subr.bf16.mxu0 0
      %1520 = vmatpush1.bf16.msra.mxu0 0
      %1521 = vmatprep.mubr.bf16.mxu0 0
      %1522 = vmatmul.mubr.bf16.gmra.mrb[0].mxu0 %v1478
      %v1523 = vpop.f32.mrb[0].mxu0
      %v1524 = vadd.f32 %v1462, %v1523
      %v1525 = vpop.f32.mrb[0].mxu0
      %v1526 = vpop.f32.mrb[0].mxu0
      %v1527 = vadd.f32 %v1462, %v1526
      %v1528 = vpop.f32.mrb[0].mxu0
      %1529 = vmatprep.mubr.bf16.mxu0 0
      %1530 = vmatmul.mubr.bf16.gmra.mrb[0].mxu0 %v1481
      %v1531 = vpop.f32.mrb[0].mxu0
      %v1532 = vadd.f32 %v1462, %v1531
      %v1533 = vpop.f32.mrb[0].mxu0
      %v1534 = vpop.f32.mrb[0].mxu0
      %v1535 = vadd.f32 %v1462, %v1534
      %v1536 = vpop.f32.mrb[0].mxu0
      %1537 = vmatprep.mubr.bf16.mxu0 0
      %1538 = vmatmul.mubr.bf16.gmra.mrb[0].mxu0 %v1484
      %v1539 = vpop.f32.mrb[0].mxu0
      %v1540 = vadd.f32 %v1462, %v1539
      %v1541 = vpop.f32.mrb[0].mxu0
      %v1542 = vpop.f32.mrb[0].mxu0
      %v1543 = vadd.f32 %v1462, %v1542
      %v1544 = vpop.f32.mrb[0].mxu0
      %1545 = vmatprep.mubr.bf16.mxu0 0
      %1546 = vmatmul.mubr.bf16.gmra.mrb[0].mxu0 %v1487
      %v1547 = vpop.f32.mrb[0].mxu0
      %v1548 = vadd.f32 %v1462, %v1547
      %v1549 = vpop.f32.mrb[0].mxu0
      %v1550 = vpop.f32.mrb[0].mxu0
      %v1551 = vadd.f32 %v1462, %v1550
      %v1552 = vpop.f32.mrb[0].mxu0
      %1553 = vdwg.mxu0
      %vm1554 = vcmask 64512
      %v1555 = vsel %vm1554, %v1524, 0.0
      %v1556 = vsel %vm1554, %v1527, 0.0
      %v1557 = vadd.f32 %v1555, %v1556
      %v1558 = vsel %vm1554, %v1532, 0.0
      %v1559 = vadd.f32 %v1557, %v1558
      %v1560 = vsel %vm1554, %v1535, 0.0
      %v1561 = vadd.f32 %v1559, %v1560
      %v1562 = vsel %vm1554, %v1540, 0.0
      %v1563 = vadd.f32 %v1561, %v1562
      %v1564 = vsel %vm1554, %v1543, 0.0
      %v1565 = vadd.f32 %v1563, %v1564
      %v1566 = vsel %vm1554, %v1548, 0.0
      %v1567 = vadd.f32 %v1565, %v1566
      %v1568 = vsel %vm1554, %v1551, 0.0
      %v1569 = vadd.f32 %v1567, %v1568
      %v1570 = vrot.slane %v1569, 4
      %v1571 = vadd.f32 %v1569, %v1570
      %v1572 = vrot.slane %v1571, 2
      %v1573 = vadd.f32 %v1571, %v1572
      %v1574 = vrot.slane %v1573, 1
      %v1575 = vadd.f32 %v1573, %v1574
      %vm1576 = vcmask 57344
      %1577 = vst.msk [vmem:[%s346] sm:$0x1] %vm1576, %v1575
      %v1578 = vmul.f32 %v1524, %v1524
      %v1579 = vmul.f32 %v1527, %v1527
      %v1580 = vmul.f32 %v1532, %v1532
      %v1581 = vmul.f32 %v1535, %v1535
      %v1582 = vmul.f32 %v1540, %v1540
      %v1583 = vmul.f32 %v1543, %v1543
      %v1584 = vmul.f32 %v1548, %v1548
      %v1585 = vmul.f32 %v1551, %v1551
      %v1586 = vsel %vm1554, %v1578, 0.0
      %v1587 = vsel %vm1554, %v1579, 0.0
      %v1588 = vadd.f32 %v1586, %v1587
      %v1589 = vsel %vm1554, %v1580, 0.0
      %v1590 = vadd.f32 %v1588, %v1589
      %v1591 = vsel %vm1554, %v1581, 0.0
      %v1592 = vadd.f32 %v1590, %v1591
      %v1593 = vsel %vm1554, %v1582, 0.0
      %v1594 = vadd.f32 %v1592, %v1593
      %v1595 = vsel %vm1554, %v1583, 0.0
      %v1596 = vadd.f32 %v1594, %v1595
      %v1597 = vsel %vm1554, %v1584, 0.0
      %v1598 = vadd.f32 %v1596, %v1597
      %v1599 = vsel %vm1554, %v1585, 0.0
      %v1600 = vadd.f32 %v1598, %v1599
      %v1601 = vrot.slane %v1600, 4
      %v1602 = vadd.f32 %v1600, %v1601
      %v1603 = vrot.slane %v1602, 2
      %v1604 = vadd.f32 %v1602, %v1603
      %v1605 = vrot.slane %v1604, 1
      %v1606 = vadd.f32 %v1604, %v1605
      %1607 = vst.msk [vmem:[%s349] sm:$0x1] %vm1576, %v1606
      %v1608 = vpack.c.bf16 %v1527, %v1524
      %v1609 = vpack.c.bf16 %v1535, %v1532
      %v1610 = vpack.c.bf16 %v1543, %v1540
      %v1611 = vpack.c.bf16 %v1551, %v1548
      %v1616 = vunpack.c.l.b16 %v1608
      %v1617 = vunpack.c.h.b16 %v1608
      %v1618 = vunpack.c.l.b16 %v1609
      %v1619 = vunpack.c.h.b16 %v1609
      %v1620 = vunpack.c.l.b16 %v1610
      %v1621 = vunpack.c.h.b16 %v1610
      %v1622 = vunpack.c.l.b16 %v1611
      %v1623 = vunpack.c.h.b16 %v1611
      %v1624 = vpack.c.b16 %v1616, %v1616
      %v1625 = vpack.c.b16 %v1617, %v1617
      %v1626 = vpack.c.b16 %v1618, %v1618
      %v1627 = vpack.c.b16 %v1619, %v1619
      %v1628 = vpack.c.b16 %v1620, %v1620
      %v1629 = vpack.c.b16 %v1621, %v1621
      %v1630 = vpack.c.b16 %v1622, %v1622
      %v1631 = vpack.c.b16 %v1623, %v1623
      %vm1640 = vcmask 60416
      %1641 = vst.msk [vmem:[%s343] sm:$0xf] %vm1640, %v1624
      %1642 = vst.msk [vmem:[%s343 + $0x4] sm:$0xf] %vm1640, %v1625
      %1643 = vst.msk [vmem:[%s343 + $0x8] sm:$0xf] %vm1640, %v1626
      %1644 = vst.msk [vmem:[%s343 + $0xc] sm:$0xf] %vm1640, %v1627
      %1645 = vst.msk [vmem:[%s343 + $0x10] sm:$0xf] %vm1640, %v1628
      %1646 = vst.msk [vmem:[%s343 + $0x14] sm:$0xf] %vm1640, %v1629
      %1647 = vst.msk [vmem:[%s343 + $0x18] sm:$0xf] %vm1640, %v1630
      %1648 = vst.msk [vmem:[%s343 + $0x1c] sm:$0xf] %vm1640, %v1631
      %p1649 = scmp.lt.s32.totalorder %s21, 1
      %s1650 = scalar_select %p1649, %s21, 1
      %s1651 = smul.addr %s1650, 8
      %s1652 = smul.addr %s1651, 4
      %s1653 = scalar_lea.vmem %s7, %s1652
      %p1654 = scmp.lt.s32.totalorder %s21, 1
      %s1655 = scalar_select %p1654, %s21, 1
      %s1656 = scalar_lea.vmem %s8, %s1655
      %p1657 = scmp.lt.s32.totalorder %s21, 1
      %s1658 = scalar_select %p1657, %s21, 1
      %s1659 = scalar_lea.vmem %s9, %s1658
      // Predicated region
      $region49: #{patch_merging_forward.2} parent=47 // pred_check
        %p1660 = pneg %p191
      $region50: #{patch_merging_forward.2} parent=47 // pred_check_branch
        %1662 = sbr.rel (%p1660) target = $region52
      $region51: #{patch_merging_forward.2} parent=47 // pred_region
        _
      $region52: #{patch_merging_forward.2} parent=47 // pred_fallthru
        _
      // Predicated region
      $region53: #{patch_merging_forward.2} parent=47 // pred_check
        %p1663 = pneg %p217
      $region54: #{patch_merging_forward.2} parent=47 // pred_check_branch
        %1665 = sbr.rel (%p1663) target = $region56
      $region55: #{patch_merging_forward.2} parent=47 // pred_region
        _
      $region56: #{patch_merging_forward.2} parent=47 // pred_fallthru
        _
      // Predicated region
      $region57: #{patch_merging_forward.2} parent=47 // pred_check
        %p1666 = pneg %p243
      $region58: #{patch_merging_forward.2} parent=47 // pred_check_branch
        %1668 = sbr.rel (%p1666) target = $region60
      $region59: #{patch_merging_forward.2} parent=47 // pred_region
        _
      $region60: #{patch_merging_forward.2} parent=47 // pred_fallthru
        _
    $region48: #{patch_merging_forward.2} parent=5 // pred_fallthru
      _
    %p1669 = scmp.le.s32.totalorder 2, %s16
    // Predicated region
    $region61: #{patch_merging_forward.2} parent=5 // pred_check
      %p1670 = pneg %p1669
    $region62: #{patch_merging_forward.2} parent=5 // pred_check_branch
      %1672 = sbr.rel (%p1670) target = $region64
    $region63: #{patch_merging_forward.2} parent=5 // pred_region
      %s1673 = ssub.s32 %s16, 2
      // Predicated region
      $region65: #{patch_merging_forward.2} parent=63 // pred_check
        %p1674 = pneg %p197
      $region66: #{patch_merging_forward.2} parent=63 // pred_check_branch
        %1676 = sbr.rel (%p1674) target = $region68
      $region67: #{patch_merging_forward.2} parent=63 // pred_region
        %p1677 = scmp.lt.s32.totalorder %s22, 1
        %s1678 = scalar_select %p1677, %s22, 1
        %s1679 = smul.addr %s1678, 8
        %s1680 = smul.addr %s1679, 4
        %s1681 = scalar_lea.vmem %s7, %s1680
      $region68: #{patch_merging_forward.2} parent=63 // pred_fallthru
        _
      // Predicated region
      $region69: #{patch_merging_forward.2} parent=63 // pred_check
        %p1682 = pneg %p223
      $region70: #{patch_merging_forward.2} parent=63 // pred_check_branch
        %1684 = sbr.rel (%p1682) target = $region72
      $region71: #{patch_merging_forward.2} parent=63 // pred_region
        %p1685 = scmp.lt.s32.totalorder %s22, 1
        %s1686 = scalar_select %p1685, %s22, 1
        %s1687 = scalar_lea.vmem %s8, %s1686
      $region72: #{patch_merging_forward.2} parent=63 // pred_fallthru
        _
      // Predicated region
      $region73: #{patch_merging_forward.2} parent=63 // pred_check
        %p1688 = pneg %p249
      $region74: #{patch_merging_forward.2} parent=63 // pred_check_branch
        %1690 = sbr.rel (%p1688) target = $region76
      $region75: #{patch_merging_forward.2} parent=63 // pred_region
        %p1691 = scmp.lt.s32.totalorder %s22, 1
        %s1692 = scalar_select %p1691, %s22, 1
        %s1693 = scalar_lea.vmem %s9, %s1692
      $region76: #{patch_merging_forward.2} parent=63 // pred_fallthru
        _
    $region64: #{patch_merging_forward.2} parent=5 // pred_fallthru
      _
  $region6: #{patch_merging_forward.2} parent=0 // loop_footer
    %s20 = sadd.s32 1, %s16
  $region7: #{patch_merging_forward.2} parent=0 // loop_footer_branch
    %15 = sbr.rel target = $region3
  $region8: #{patch_merging_forward.2} parent=0 // loop_exit
    _

</llo_original>
